<compile_context>
chip_gen: v5e
topology: v5e:2x2
jax: 0.10.0
libtpu: 0.0.40
codegen_flags: <defaults>
</compile_context>

<pallas_src>
import functools
import math

import jax
import jax.numpy as jnp
from jax.experimental import pallas as pl
from jax.experimental.pallas import tpu as pltpu

EPS = 1e-6
NEG_INF = -1e9

KPARAM_NAMES = (
    "n1a", "n1b", "wqkv1", "bqkv1", "wo1", "bo1",
    "n2a", "n2b", "wq2", "bq2", "wkv2", "bkv2", "wo2", "bo2",
    "n3a", "n3b", "f1w", "f1b", "f2w", "f2b",
)


# ---------------------------------------------------------------------------
# In-kernel math (2-D MXU matmuls, (H*B)-batched attention, bf16 operands,
# f32 accumulation).
# ---------------------------------------------------------------------------
def _norm(x, alpha, bias):
    # PyTorch Norm: alpha * (x - mean) / (std + eps) + bias, unbiased std (N-1).
    d = x.shape[-1]
    mean = jnp.mean(x, axis=-1, keepdims=True)
    c = x - mean
    var = jnp.sum(c * c, axis=-1, keepdims=True) * (1.0 / (d - 1))
    inv = pl.reciprocal(jnp.sqrt(var) + EPS, approx=True)   # EUP, not a VPU divide
    return alpha * (c * inv) + bias


def _project(x3, w, b):
    # (B, S, Din) @ (Din, F) + (1, F) -> (B, S, F); one 2-D MXU matmul.
    bsz, seq, din = x3.shape
    y = jnp.dot(x3.reshape(bsz * seq, din).astype(jnp.bfloat16), w,
                preferred_element_type=jnp.float32) + b
    return y.reshape(bsz, seq, w.shape[1])


def _heads_from(y, offset, heads, dk):
    # Gather per-head column blocks of y (B, S, F) into (H*B, S, dk) bf16.
    # Column-block slices + leading-axis stack only: no lane-splitting reshapes
    # and no sublane transposes (layout-safe relayout).
    bsz, seq = y.shape[0], y.shape[1]
    parts = [y[:, :, offset + h * dk: offset + (h + 1) * dk] for h in range(heads)]
    return jnp.stack(parts, axis=0).reshape(heads * bsz, seq, dk).astype(jnp.bfloat16)


def _attn_core(q, k, v, madd, heads):
    # q: (H*B, Sq, dk) bf16; k, v: (H*B, Sk, dk) bf16; madd: (B, Sqm, Sk) additive f32.
    hb, sq, _ = q.shape
    bsz = hb // heads
    sk = k.shape[1]
    s = jnp.einsum("nqd,nkd->nqk", q, k, preferred_element_type=jnp.float32)
    # Additive mask broadcast over heads along the leading axis only.
    madd3 = jnp.broadcast_to(madd[None], (heads, bsz, madd.shape[1], sk))
    madd3 = madd3.reshape(heads * bsz, madd.shape[1], sk)
    s = s + madd3
    m = jnp.max(s, axis=-1, keepdims=True)
    e = jnp.exp(s - m)
    p = e * pl.reciprocal(jnp.sum(e, axis=-1, keepdims=True), approx=True)
    return jnp.einsum("nqk,nkd->nqd", p.astype(jnp.bfloat16), v,
                      preferred_element_type=jnp.float32)    # (H*B, Sq, dk) f32


def _merge_heads(o, heads, wo, bo):
    # (H*B, S, dk) -> (B, S, H*dk) via lane concat, then ONE (B*S,D)@(D,D) matmul.
    hb, seq, dk = o.shape
    bsz = hb // heads
    o4 = o.reshape(heads, bsz, seq, dk)
    oc = jnp.concatenate([o4[h] for h in range(heads)], axis=-1)   # (B, S, H*dk)
    return _project(oc, wo, bo)


def _self_attn(xn, madd, wqkv, bqkv, wo, bo, heads):
    d = xn.shape[-1]
    dk = d // heads
    qkv = _project(xn, wqkv, bqkv)                   # (B, S, 3D), one fused MXU pass
    q = _heads_from(qkv, 0 * d, heads, dk)           # scale already folded into wqkv
    k = _heads_from(qkv, 1 * d, heads, dk)
    v = _heads_from(qkv, 2 * d, heads, dk)
    return _merge_heads(_attn_core(q, k, v, madd, heads), heads, wo, bo)


def _cross_attn(xn, e, madd, wq, bq, wkv, bkv, wo, bo, heads):
    d = xn.shape[-1]
    dk = d // heads
    q = _heads_from(_project(xn, wq, bq), 0, heads, dk)      # (H*B, S, dk)
    kv = _project(e, wkv, bkv)                               # (B, Se, 2D), fused k|v
    k = _heads_from(kv, 0, heads, dk)
    v = _heads_from(kv, d, heads, dk)
    return _merge_heads(_attn_core(q, k, v, madd, heads), heads, wo, bo)


def _ff(xn, w1, b1, w2, b2):
    h = jnp.maximum(_project(xn, w1, b1), 0.0)
    return _project(h, w2, b2)


def _decoder_math(x, e, tmadd, smadd, p, heads):
    xn = _norm(x, p["n1a"], p["n1b"])
    x = x + _self_attn(xn, tmadd, p["wqkv1"], p["bqkv1"], p["wo1"], p["bo1"], heads)
    xn = _norm(x, p["n2a"], p["n2b"])
    x = x + _cross_attn(xn, e, smadd, p["wq2"], p["bq2"], p["wkv2"], p["bkv2"],
                        p["wo2"], p["bo2"], heads)
    xn = _norm(x, p["n3a"], p["n3b"])
    x = x + _ff(xn, p["f1w"], p["f1b"], p["f2w"], p["f2b"])
    return x


# ---------------------------------------------------------------------------
# Pallas kernel: single invocation, everything resident in VMEM (toy sizes).
# ---------------------------------------------------------------------------
def _kernel(heads, x_ref, e_ref, tmadd_ref, smadd_ref, *rest):
    param_refs, out_ref = rest[:-1], rest[-1]
    p = {name: r[...] for name, r in zip(KPARAM_NAMES, param_refs)}
    out = _decoder_math(x_ref[...], e_ref[...], tmadd_ref[...], smadd_ref[...],
                        p, heads)
    out_ref[...] = out.astype(out_ref.dtype)


def decoder_layer_pallas(x, e_out, src_mask, trg_mask, kparams, heads):
    B, S, D = x.shape
    # Additive f32 masks precomputed OUTSIDE the kernel
    # (same semantics as torch masked_fill(mask == 0, -1e9)).
    tmadd = jnp.where(trg_mask == 0, jnp.float32(NEG_INF), jnp.float32(0.0))
    smadd = jnp.where(src_mask == 0, jnp.float32(NEG_INF), jnp.float32(0.0))
    inputs = [x, e_out, tmadd, smadd] + [kparams[n] for n in KPARAM_NAMES]
    return pl.pallas_call(
        functools.partial(_kernel, heads),
        out_shape=jax.ShapeDtypeStruct((B, S, D), jnp.float32),
        in_specs=[pl.BlockSpec(memory_space=pltpu.MemorySpace.VMEM) for _ in inputs],
        out_specs=pl.BlockSpec(memory_space=pltpu.MemorySpace.VMEM),
    )(*inputs)


# ---------------------------------------------------------------------------
# Parameter init (torch-like logical layout) and packing to the kernel layout.
# ---------------------------------------------------------------------------
def init_params(d_model, d_ff, key):
    keys = iter(jax.random.split(key, 64))
    scale = 0.1
    p = {}
    for n in ("n1", "n2", "n3"):
        p[n + "a"] = jnp.ones((1, d_model), jnp.float32)   # Norm.alpha
        p[n + "b"] = jnp.zeros((1, d_model), jnp.float32)  # Norm.bias
    for pre in ("q1", "k1", "v1", "o1", "q2", "k2", "v2", "o2"):
        p[pre + "w"] = scale * jax.random.normal(next(keys), (d_model, d_model), jnp.float32)
        p[pre + "b"] = scale * jax.random.normal(next(keys), (1, d_model), jnp.float32)
    p["f1w"] = scale * jax.random.normal(next(keys), (d_model, d_ff), jnp.float32)
    p["f1b"] = scale * jax.random.normal(next(keys), (1, d_ff), jnp.float32)
    p["f2w"] = scale * jax.random.normal(next(keys), (d_ff, d_model), jnp.float32)
    p["f2b"] = scale * jax.random.normal(next(keys), (1, d_model), jnp.float32)
    return p


def pack_params(p, d_model, heads):
    """Logical (in,out) torch weights -> fused, scale-folded, bf16 kernel params."""
    dk = d_model // heads
    inv = 1.0 / math.sqrt(dk)
    bf16 = jnp.bfloat16
    kp = {}
    # self-attention: fused q|k|v columns; 1/sqrt(dk) folded into the q block (f32).
    kp["wqkv1"] = jnp.concatenate([p["q1w"] * inv, p["k1w"], p["v1w"]], axis=1).astype(bf16)
    kp["bqkv1"] = jnp.concatenate([p["q1b"] * inv, p["k1b"], p["v1b"]], axis=1)
    kp["wo1"] = p["o1w"].astype(bf16)
    kp["bo1"] = p["o1b"]
    # cross-attention: separate q (from x), fused k|v (from encoder output).
    kp["wq2"] = (p["q2w"] * inv).astype(bf16)
    kp["bq2"] = p["q2b"] * inv
    kp["wkv2"] = jnp.concatenate([p["k2w"], p["v2w"]], axis=1).astype(bf16)
    kp["bkv2"] = jnp.concatenate([p["k2b"], p["v2b"]], axis=1)
    kp["wo2"] = p["o2w"].astype(bf16)
    kp["bo2"] = p["o2b"]
    # feed-forward
    kp["f1w"] = p["f1w"].astype(bf16)
    kp["f1b"] = p["f1b"]
    kp["f2w"] = p["f2w"].astype(bf16)
    kp["f2b"] = p["f2b"]
    # norms stay f32
    for n in ("n1a", "n1b", "n2a", "n2b", "n3a", "n3b"):
        kp[n] = p[n]
    return kp


# ---------------------------------------------------------------------------
# Pure-JAX f32 reference with the original torch semantics (per-head loop).
# ---------------------------------------------------------------------------
def _ref_norm(x, alpha, bias):
    d = x.shape[-1]
    mean = jnp.mean(x, axis=-1, keepdims=True)
    var = jnp.sum((x - mean) ** 2, axis=-1, keepdims=True) / (d - 1)
    return alpha * (x - mean) / (jnp.sqrt(var) + EPS) + bias


def _ref_mha(q_in, kv_in, mask, wq, bq, wk, bk, wv, bv, wo, bo, heads):
    d_model = q_in.shape[-1]
    dk = d_model // heads
    q = q_in @ wq + bq
    k = kv_in @ wk + bk
    v = kv_in @ wv + bv
    outs = []
    for h in range(heads):
        sl = slice(h * dk, (h + 1) * dk)
        s = (q[:, sl] @ k[:, sl].T) / math.sqrt(dk)
        s = jnp.where(mask == 0, NEG_INF, s)
        outs.append(jax.nn.softmax(s, axis=-1) @ v[:, sl])
    return jnp.concatenate(outs, axis=-1) @ wo + bo


def _ref_decoder_layer(x, e, tmask, smask, p, heads):
    xn = _ref_norm(x, p["n1a"], p["n1b"])
    x = x + _ref_mha(xn, xn, tmask, p["q1w"], p["q1b"], p["k1w"], p["k1b"],
                     p["v1w"], p["v1b"], p["o1w"], p["o1b"], heads)
    xn = _ref_norm(x, p["n2a"], p["n2b"])
    x = x + _ref_mha(xn, e, smask, p["q2w"], p["q2b"], p["k2w"], p["k2b"],
                     p["v2w"], p["v2b"], p["o2w"], p["o2b"], heads)
    xn = _ref_norm(x, p["n3a"], p["n3b"])
    h = jnp.maximum(xn @ p["f1w"] + p["f1b"], 0.0)
    return x + h @ p["f2w"] + p["f2b"]


if __name__ == "__main__":
    B, S, Se, D, H, DFF = 2, 8, 12, 32, 4, 64

    root = jax.random.PRNGKey(0)
    k_x, k_e, k_p = jax.random.split(root, 3)

    x = jax.random.normal(k_x, (B, S, D), jnp.float32)
    e_out = jax.random.normal(k_e, (B, Se, D), jnp.float32)

    # causal target mask, padded-source mask (batch 1 has 3 padded positions)
    trg_mask = jnp.broadcast_to(
        jnp.tril(jnp.ones((S, S), jnp.int32)), (B, S, S)).astype(jnp.int32)
    src_mask = jnp.ones((B, 1, Se), jnp.int32).at[1, 0, Se - 3:].set(0)

    params = init_params(D, DFF, k_p)
    kparams = pack_params(params, D, H)

    out = decoder_layer_pallas(x, e_out, src_mask, trg_mask, kparams, H)
    out = jax.block_until_ready(out)

    # f32 reference with the original torch math (per-head, exact softmax).
    ref = jax.vmap(
        lambda xb, eb, tm, sm: _ref_decoder_layer(xb, eb, tm, sm, params, H)
    )(x, e_out, trg_mask, src_mask)

    assert out.shape == (B, S, D)
    assert jnp.all(jnp.isfinite(out)), "non-finite output"
    # Loose tolerance: kernel uses bf16 MXU operands + approx reciprocals (norm/softmax).
    assert jnp.allclose(out, ref, atol=1e-1, rtol=1e-1), "mismatch vs reference"

    print("KERNEL_OK")
</pallas_src>

<mosaic_0001>
module attributes {stable_mosaic.version = 11 : i64} {
  func.func @_kernel(%arg0: memref<2x8x32xf32, #tpu.memory_space<vmem>>, %arg1: memref<2x12x32xf32, #tpu.memory_space<vmem>>, %arg2: memref<2x8x8xf32, #tpu.memory_space<vmem>>, %arg3: memref<2x1x12xf32, #tpu.memory_space<vmem>>, %arg4: memref<1x32xf32, #tpu.memory_space<vmem>>, %arg5: memref<1x32xf32, #tpu.memory_space<vmem>>, %arg6: memref<32x96xbf16, #tpu.memory_space<vmem>>, %arg7: memref<1x96xf32, #tpu.memory_space<vmem>>, %arg8: memref<32x32xbf16, #tpu.memory_space<vmem>>, %arg9: memref<1x32xf32, #tpu.memory_space<vmem>>, %arg10: memref<1x32xf32, #tpu.memory_space<vmem>>, %arg11: memref<1x32xf32, #tpu.memory_space<vmem>>, %arg12: memref<32x32xbf16, #tpu.memory_space<vmem>>, %arg13: memref<1x32xf32, #tpu.memory_space<vmem>>, %arg14: memref<32x64xbf16, #tpu.memory_space<vmem>>, %arg15: memref<1x64xf32, #tpu.memory_space<vmem>>, %arg16: memref<32x32xbf16, #tpu.memory_space<vmem>>, %arg17: memref<1x32xf32, #tpu.memory_space<vmem>>, %arg18: memref<1x32xf32, #tpu.memory_space<vmem>>, %arg19: memref<1x32xf32, #tpu.memory_space<vmem>>, %arg20: memref<32x64xbf16, #tpu.memory_space<vmem>>, %arg21: memref<1x64xf32, #tpu.memory_space<vmem>>, %arg22: memref<64x32xbf16, #tpu.memory_space<vmem>>, %arg23: memref<1x32xf32, #tpu.memory_space<vmem>>, %arg24: memref<2x8x32xf32, #tpu.memory_space<vmem>>) attributes {dimension_semantics = [], scalar_prefetch = 0 : i64, scratch_operands = 0 : i64, tpu.core_type = #tpu.core_type<tc>} {
    %c0 = arith.constant 0 : index
    %c0_0 = arith.constant 0 : index
    %0 = vector.load %arg4[%c0, %c0_0] : memref<1x32xf32, #tpu.memory_space<vmem>>, vector<1x32xf32>
    %c0_1 = arith.constant 0 : index
    %c0_2 = arith.constant 0 : index
    %1 = vector.load %arg5[%c0_1, %c0_2] : memref<1x32xf32, #tpu.memory_space<vmem>>, vector<1x32xf32>
    %c0_3 = arith.constant 0 : index
    %c0_4 = arith.constant 0 : index
    %2 = vector.load %arg6[%c0_3, %c0_4] : memref<32x96xbf16, #tpu.memory_space<vmem>>, vector<32x96xbf16>
    %c0_5 = arith.constant 0 : index
    %c0_6 = arith.constant 0 : index
    %3 = vector.load %arg7[%c0_5, %c0_6] : memref<1x96xf32, #tpu.memory_space<vmem>>, vector<1x96xf32>
    %c0_7 = arith.constant 0 : index
    %c0_8 = arith.constant 0 : index
    %4 = vector.load %arg8[%c0_7, %c0_8] : memref<32x32xbf16, #tpu.memory_space<vmem>>, vector<32x32xbf16>
    %c0_9 = arith.constant 0 : index
    %c0_10 = arith.constant 0 : index
    %5 = vector.load %arg9[%c0_9, %c0_10] : memref<1x32xf32, #tpu.memory_space<vmem>>, vector<1x32xf32>
    %c0_11 = arith.constant 0 : index
    %c0_12 = arith.constant 0 : index
    %6 = vector.load %arg10[%c0_11, %c0_12] : memref<1x32xf32, #tpu.memory_space<vmem>>, vector<1x32xf32>
    %c0_13 = arith.constant 0 : index
    %c0_14 = arith.constant 0 : index
    %7 = vector.load %arg11[%c0_13, %c0_14] : memref<1x32xf32, #tpu.memory_space<vmem>>, vector<1x32xf32>
    %c0_15 = arith.constant 0 : index
    %c0_16 = arith.constant 0 : index
    %8 = vector.load %arg12[%c0_15, %c0_16] : memref<32x32xbf16, #tpu.memory_space<vmem>>, vector<32x32xbf16>
    %c0_17 = arith.constant 0 : index
    %c0_18 = arith.constant 0 : index
    %9 = vector.load %arg13[%c0_17, %c0_18] : memref<1x32xf32, #tpu.memory_space<vmem>>, vector<1x32xf32>
    %c0_19 = arith.constant 0 : index
    %c0_20 = arith.constant 0 : index
    %10 = vector.load %arg14[%c0_19, %c0_20] : memref<32x64xbf16, #tpu.memory_space<vmem>>, vector<32x64xbf16>
    %c0_21 = arith.constant 0 : index
    %c0_22 = arith.constant 0 : index
    %11 = vector.load %arg15[%c0_21, %c0_22] : memref<1x64xf32, #tpu.memory_space<vmem>>, vector<1x64xf32>
    %c0_23 = arith.constant 0 : index
    %c0_24 = arith.constant 0 : index
    %12 = vector.load %arg16[%c0_23, %c0_24] : memref<32x32xbf16, #tpu.memory_space<vmem>>, vector<32x32xbf16>
    %c0_25 = arith.constant 0 : index
    %c0_26 = arith.constant 0 : index
    %13 = vector.load %arg17[%c0_25, %c0_26] : memref<1x32xf32, #tpu.memory_space<vmem>>, vector<1x32xf32>
    %c0_27 = arith.constant 0 : index
    %c0_28 = arith.constant 0 : index
    %14 = vector.load %arg18[%c0_27, %c0_28] : memref<1x32xf32, #tpu.memory_space<vmem>>, vector<1x32xf32>
    %c0_29 = arith.constant 0 : index
    %c0_30 = arith.constant 0 : index
    %15 = vector.load %arg19[%c0_29, %c0_30] : memref<1x32xf32, #tpu.memory_space<vmem>>, vector<1x32xf32>
    %c0_31 = arith.constant 0 : index
    %c0_32 = arith.constant 0 : index
    %16 = vector.load %arg20[%c0_31, %c0_32] : memref<32x64xbf16, #tpu.memory_space<vmem>>, vector<32x64xbf16>
    %c0_33 = arith.constant 0 : index
    %c0_34 = arith.constant 0 : index
    %17 = vector.load %arg21[%c0_33, %c0_34] : memref<1x64xf32, #tpu.memory_space<vmem>>, vector<1x64xf32>
    %c0_35 = arith.constant 0 : index
    %c0_36 = arith.constant 0 : index
    %18 = vector.load %arg22[%c0_35, %c0_36] : memref<64x32xbf16, #tpu.memory_space<vmem>>, vector<64x32xbf16>
    %c0_37 = arith.constant 0 : index
    %c0_38 = arith.constant 0 : index
    %19 = vector.load %arg23[%c0_37, %c0_38] : memref<1x32xf32, #tpu.memory_space<vmem>>, vector<1x32xf32>
    %c0_39 = arith.constant 0 : index
    %c0_40 = arith.constant 0 : index
    %c0_41 = arith.constant 0 : index
    %20 = vector.load %arg0[%c0_39, %c0_40, %c0_41] : memref<2x8x32xf32, #tpu.memory_space<vmem>>, vector<2x8x32xf32>
    %c0_42 = arith.constant 0 : index
    %c0_43 = arith.constant 0 : index
    %c0_44 = arith.constant 0 : index
    %21 = vector.load %arg1[%c0_42, %c0_43, %c0_44] : memref<2x12x32xf32, #tpu.memory_space<vmem>>, vector<2x12x32xf32>
    %c0_45 = arith.constant 0 : index
    %c0_46 = arith.constant 0 : index
    %c0_47 = arith.constant 0 : index
    %22 = vector.load %arg2[%c0_45, %c0_46, %c0_47] : memref<2x8x8xf32, #tpu.memory_space<vmem>>, vector<2x8x8xf32>
    %c0_48 = arith.constant 0 : index
    %c0_49 = arith.constant 0 : index
    %c0_50 = arith.constant 0 : index
    %23 = vector.load %arg3[%c0_48, %c0_49, %c0_50] : memref<2x1x12xf32, #tpu.memory_space<vmem>>, vector<2x1x12xf32>
    %cst = arith.constant dense<0.000000e+00> : vector<2x8xf32>
    %24 = vector.multi_reduction <add>, %20, %cst [2] : vector<2x8x32xf32> to vector<2x8xf32>
    %25 = vector.shape_cast %24 : vector<2x8xf32> to vector<2x8x1xf32>
    %cst_51 = arith.constant 3.200000e+01 : f32
    %26 = vector.broadcast %cst_51 : f32 to vector<2x8x1xf32>
    %27 = arith.divf %25, %26 : vector<2x8x1xf32>
    %28 = vector.broadcast %27 : vector<2x8x1xf32> to vector<2x8x32xf32>
    %29 = arith.subf %20, %28 : vector<2x8x32xf32>
    %30 = arith.mulf %29, %29 : vector<2x8x32xf32>
    %cst_52 = arith.constant dense<0.000000e+00> : vector<2x8xf32>
    %31 = vector.multi_reduction <add>, %30, %cst_52 [2] : vector<2x8x32xf32> to vector<2x8xf32>
    %32 = vector.shape_cast %31 : vector<2x8xf32> to vector<2x8x1xf32>
    %cst_53 = arith.constant 0.0322580636 : f32
    %33 = vector.broadcast %cst_53 : f32 to vector<2x8x1xf32>
    %34 = arith.mulf %32, %33 : vector<2x8x1xf32>
    %35 = math.sqrt %34 : vector<2x8x1xf32>
    %cst_54 = arith.constant 9.99999997E-7 : f32
    %36 = vector.broadcast %cst_54 : f32 to vector<2x8x1xf32>
    %37 = arith.addf %35, %36 : vector<2x8x1xf32>
    %38 = tpu.reciprocal %37 {approx = true} : vector<2x8x1xf32> -> vector<2x8x1xf32>
    %39 = vector.broadcast %38 : vector<2x8x1xf32> to vector<2x8x32xf32>
    %40 = arith.mulf %29, %39 : vector<2x8x32xf32>
    %41 = vector.shape_cast %0 : vector<1x32xf32> to vector<1x1x32xf32>
    %42 = vector.broadcast %41 : vector<1x1x32xf32> to vector<2x8x32xf32>
    %43 = arith.mulf %42, %40 : vector<2x8x32xf32>
    %44 = vector.shape_cast %1 : vector<1x32xf32> to vector<1x1x32xf32>
    %45 = vector.broadcast %44 : vector<1x1x32xf32> to vector<2x8x32xf32>
    %46 = arith.addf %43, %45 : vector<2x8x32xf32>
    %47 = vector.shape_cast %46 : vector<2x8x32xf32> to vector<16x32xf32>
    %48 = arith.truncf %47 : vector<16x32xf32> to vector<16x32xbf16>
    %cst_55 = arith.constant dense<0.000000e+00> : vector<16x96xf32>
    %49 = tpu.matmul %48, %2, %cst_55 {dimension_numbers = #tpu.dot_dimension_numbers<[1], [0], [0], [1], [0, 0, 1, 1], [], []>} : vector<16x32xbf16>, vector<32x96xbf16>, vector<16x96xf32> -> vector<16x96xf32>
    %50 = vector.broadcast %3 : vector<1x96xf32> to vector<16x96xf32>
    %51 = arith.addf %49, %50 : vector<16x96xf32>
    %52 = vector.shape_cast %51 : vector<16x96xf32> to vector<2x8x96xf32>
    %53 = vector.extract_strided_slice %52 {offsets = [0, 0, 0], sizes = [2, 8, 8], strides = [1, 1, 1]} : vector<2x8x96xf32> to vector<2x8x8xf32>
    %54 = vector.extract_strided_slice %52 {offsets = [0, 0, 8], sizes = [2, 8, 8], strides = [1, 1, 1]} : vector<2x8x96xf32> to vector<2x8x8xf32>
    %55 = vector.extract_strided_slice %52 {offsets = [0, 0, 16], sizes = [2, 8, 8], strides = [1, 1, 1]} : vector<2x8x96xf32> to vector<2x8x8xf32>
    %56 = vector.extract_strided_slice %52 {offsets = [0, 0, 24], sizes = [2, 8, 8], strides = [1, 1, 1]} : vector<2x8x96xf32> to vector<2x8x8xf32>
    %57 = vector.shape_cast %53 : vector<2x8x8xf32> to vector<1x2x8x8xf32>
    %58 = vector.shape_cast %54 : vector<2x8x8xf32> to vector<1x2x8x8xf32>
    %59 = vector.shape_cast %55 : vector<2x8x8xf32> to vector<1x2x8x8xf32>
    %60 = vector.shape_cast %56 : vector<2x8x8xf32> to vector<1x2x8x8xf32>
    %61 = tpu.concatenate %57, %58, %59, %60 in 0 : vector<1x2x8x8xf32>, vector<1x2x8x8xf32>, vector<1x2x8x8xf32>, vector<1x2x8x8xf32> -> vector<4x2x8x8xf32>
    %62 = vector.shape_cast %61 : vector<4x2x8x8xf32> to vector<8x8x8xf32>
    %63 = arith.truncf %62 : vector<8x8x8xf32> to vector<8x8x8xbf16>
    %64 = vector.extract_strided_slice %52 {offsets = [0, 0, 32], sizes = [2, 8, 8], strides = [1, 1, 1]} : vector<2x8x96xf32> to vector<2x8x8xf32>
    %65 = vector.extract_strided_slice %52 {offsets = [0, 0, 40], sizes = [2, 8, 8], strides = [1, 1, 1]} : vector<2x8x96xf32> to vector<2x8x8xf32>
    %66 = vector.extract_strided_slice %52 {offsets = [0, 0, 48], sizes = [2, 8, 8], strides = [1, 1, 1]} : vector<2x8x96xf32> to vector<2x8x8xf32>
    %67 = vector.extract_strided_slice %52 {offsets = [0, 0, 56], sizes = [2, 8, 8], strides = [1, 1, 1]} : vector<2x8x96xf32> to vector<2x8x8xf32>
    %68 = vector.shape_cast %64 : vector<2x8x8xf32> to vector<1x2x8x8xf32>
    %69 = vector.shape_cast %65 : vector<2x8x8xf32> to vector<1x2x8x8xf32>
    %70 = vector.shape_cast %66 : vector<2x8x8xf32> to vector<1x2x8x8xf32>
    %71 = vector.shape_cast %67 : vector<2x8x8xf32> to vector<1x2x8x8xf32>
    %72 = tpu.concatenate %68, %69, %70, %71 in 0 : vector<1x2x8x8xf32>, vector<1x2x8x8xf32>, vector<1x2x8x8xf32>, vector<1x2x8x8xf32> -> vector<4x2x8x8xf32>
    %73 = vector.shape_cast %72 : vector<4x2x8x8xf32> to vector<8x8x8xf32>
    %74 = arith.truncf %73 : vector<8x8x8xf32> to vector<8x8x8xbf16>
    %75 = vector.extract_strided_slice %52 {offsets = [0, 0, 64], sizes = [2, 8, 8], strides = [1, 1, 1]} : vector<2x8x96xf32> to vector<2x8x8xf32>
    %76 = vector.extract_strided_slice %52 {offsets = [0, 0, 72], sizes = [2, 8, 8], strides = [1, 1, 1]} : vector<2x8x96xf32> to vector<2x8x8xf32>
    %77 = vector.extract_strided_slice %52 {offsets = [0, 0, 80], sizes = [2, 8, 8], strides = [1, 1, 1]} : vector<2x8x96xf32> to vector<2x8x8xf32>
    %78 = vector.extract_strided_slice %52 {offsets = [0, 0, 88], sizes = [2, 8, 8], strides = [1, 1, 1]} : vector<2x8x96xf32> to vector<2x8x8xf32>
    %79 = vector.shape_cast %75 : vector<2x8x8xf32> to vector<1x2x8x8xf32>
    %80 = vector.shape_cast %76 : vector<2x8x8xf32> to vector<1x2x8x8xf32>
    %81 = vector.shape_cast %77 : vector<2x8x8xf32> to vector<1x2x8x8xf32>
    %82 = vector.shape_cast %78 : vector<2x8x8xf32> to vector<1x2x8x8xf32>
    %83 = tpu.concatenate %79, %80, %81, %82 in 0 : vector<1x2x8x8xf32>, vector<1x2x8x8xf32>, vector<1x2x8x8xf32>, vector<1x2x8x8xf32> -> vector<4x2x8x8xf32>
    %84 = vector.shape_cast %83 : vector<4x2x8x8xf32> to vector<8x8x8xf32>
    %85 = arith.truncf %84 : vector<8x8x8xf32> to vector<8x8x8xbf16>
    "tpu.trace_start"() <{level = 10 : i32, message = "nqd,nkd->nqk"}> : () -> ()
    %cst_56 = arith.constant dense<0.000000e+00> : vector<8x8x8xf32>
    %86 = tpu.matmul %63, %74, %cst_56 {dimension_numbers = #tpu.dot_dimension_numbers<[2], [2], [1], [1], [0, 0, 0, 1, 1, 1], [0], [0]>} : vector<8x8x8xbf16>, vector<8x8x8xbf16>, vector<8x8x8xf32> -> vector<8x8x8xf32>
    "tpu.trace_stop"() : () -> ()
    %87 = vector.shape_cast %22 : vector<2x8x8xf32> to vector<1x2x8x8xf32>
    %88 = vector.shape_cast %87 : vector<1x2x8x8xf32> to vector<1x2x8x8xf32>
    %89 = vector.broadcast %88 : vector<1x2x8x8xf32> to vector<4x2x8x8xf32>
    %90 = vector.shape_cast %89 : vector<4x2x8x8xf32> to vector<8x8x8xf32>
    %91 = arith.addf %86, %90 : vector<8x8x8xf32>
    %cst_57 = arith.constant dense<0xFF800000> : vector<8x8xf32>
    %92 = vector.multi_reduction <maximumf>, %91, %cst_57 [2] : vector<8x8x8xf32> to vector<8x8xf32>
    %93 = vector.shape_cast %92 : vector<8x8xf32> to vector<8x8x1xf32>
    %94 = vector.broadcast %93 : vector<8x8x1xf32> to vector<8x8x8xf32>
    %95 = arith.subf %91, %94 : vector<8x8x8xf32>
    %96 = math.exp %95 : vector<8x8x8xf32>
    %cst_58 = arith.constant dense<0.000000e+00> : vector<8x8xf32>
    %97 = vector.multi_reduction <add>, %96, %cst_58 [2] : vector<8x8x8xf32> to vector<8x8xf32>
    %98 = vector.shape_cast %97 : vector<8x8xf32> to vector<8x8x1xf32>
    %99 = tpu.reciprocal %98 {approx = true} : vector<8x8x1xf32> -> vector<8x8x1xf32>
    %100 = vector.broadcast %99 : vector<8x8x1xf32> to vector<8x8x8xf32>
    %101 = arith.mulf %96, %100 : vector<8x8x8xf32>
    %102 = arith.truncf %101 : vector<8x8x8xf32> to vector<8x8x8xbf16>
    "tpu.trace_start"() <{level = 10 : i32, message = "nqk,nkd->nqd"}> : () -> ()
    %cst_59 = arith.constant dense<0.000000e+00> : vector<8x8x8xf32>
    %103 = tpu.matmul %102, %85, %cst_59 {dimension_numbers = #tpu.dot_dimension_numbers<[2], [1], [1], [2], [0, 0, 0, 1, 1, 2], [0], [0]>} : vector<8x8x8xbf16>, vector<8x8x8xbf16>, vector<8x8x8xf32> -> vector<8x8x8xf32>
    "tpu.trace_stop"() : () -> ()
    %104 = vector.shape_cast %103 : vector<8x8x8xf32> to vector<4x2x8x8xf32>
    %105 = vector.extract_strided_slice %104 {offsets = [0, 0, 0, 0], sizes = [1, 2, 8, 8], strides = [1, 1, 1, 1]} : vector<4x2x8x8xf32> to vector<1x2x8x8xf32>
    %106 = vector.shape_cast %105 : vector<1x2x8x8xf32> to vector<2x8x8xf32>
    %107 = vector.extract_strided_slice %104 {offsets = [1, 0, 0, 0], sizes = [1, 2, 8, 8], strides = [1, 1, 1, 1]} : vector<4x2x8x8xf32> to vector<1x2x8x8xf32>
    %108 = vector.shape_cast %107 : vector<1x2x8x8xf32> to vector<2x8x8xf32>
    %109 = vector.extract_strided_slice %104 {offsets = [2, 0, 0, 0], sizes = [1, 2, 8, 8], strides = [1, 1, 1, 1]} : vector<4x2x8x8xf32> to vector<1x2x8x8xf32>
    %110 = vector.shape_cast %109 : vector<1x2x8x8xf32> to vector<2x8x8xf32>
    %111 = vector.extract_strided_slice %104 {offsets = [3, 0, 0, 0], sizes = [1, 2, 8, 8], strides = [1, 1, 1, 1]} : vector<4x2x8x8xf32> to vector<1x2x8x8xf32>
    %112 = vector.shape_cast %111 : vector<1x2x8x8xf32> to vector<2x8x8xf32>
    %113 = tpu.concatenate %106, %108, %110, %112 in 2 : vector<2x8x8xf32>, vector<2x8x8xf32>, vector<2x8x8xf32>, vector<2x8x8xf32> -> vector<2x8x32xf32>
    %114 = vector.shape_cast %113 : vector<2x8x32xf32> to vector<16x32xf32>
    %115 = arith.truncf %114 : vector<16x32xf32> to vector<16x32xbf16>
    %cst_60 = arith.constant dense<0.000000e+00> : vector<16x32xf32>
    %116 = tpu.matmul %115, %4, %cst_60 {dimension_numbers = #tpu.dot_dimension_numbers<[1], [0], [0], [1], [0, 0, 1, 1], [], []>} : vector<16x32xbf16>, vector<32x32xbf16>, vector<16x32xf32> -> vector<16x32xf32>
    %117 = vector.broadcast %5 : vector<1x32xf32> to vector<16x32xf32>
    %118 = arith.addf %116, %117 : vector<16x32xf32>
    %119 = vector.shape_cast %118 : vector<16x32xf32> to vector<2x8x32xf32>
    %120 = arith.addf %20, %119 : vector<2x8x32xf32>
    %cst_61 = arith.constant dense<0.000000e+00> : vector<2x8xf32>
    %121 = vector.multi_reduction <add>, %120, %cst_61 [2] : vector<2x8x32xf32> to vector<2x8xf32>
    %122 = vector.shape_cast %121 : vector<2x8xf32> to vector<2x8x1xf32>
    %cst_62 = arith.constant 3.200000e+01 : f32
    %123 = vector.broadcast %cst_62 : f32 to vector<2x8x1xf32>
    %124 = arith.divf %122, %123 : vector<2x8x1xf32>
    %125 = vector.broadcast %124 : vector<2x8x1xf32> to vector<2x8x32xf32>
    %126 = arith.subf %120, %125 : vector<2x8x32xf32>
    %127 = arith.mulf %126, %126 : vector<2x8x32xf32>
    %cst_63 = arith.constant dense<0.000000e+00> : vector<2x8xf32>
    %128 = vector.multi_reduction <add>, %127, %cst_63 [2] : vector<2x8x32xf32> to vector<2x8xf32>
    %129 = vector.shape_cast %128 : vector<2x8xf32> to vector<2x8x1xf32>
    %cst_64 = arith.constant 0.0322580636 : f32
    %130 = vector.broadcast %cst_64 : f32 to vector<2x8x1xf32>
    %131 = arith.mulf %129, %130 : vector<2x8x1xf32>
    %132 = math.sqrt %131 : vector<2x8x1xf32>
    %cst_65 = arith.constant 9.99999997E-7 : f32
    %133 = vector.broadcast %cst_65 : f32 to vector<2x8x1xf32>
    %134 = arith.addf %132, %133 : vector<2x8x1xf32>
    %135 = tpu.reciprocal %134 {approx = true} : vector<2x8x1xf32> -> vector<2x8x1xf32>
    %136 = vector.broadcast %135 : vector<2x8x1xf32> to vector<2x8x32xf32>
    %137 = arith.mulf %126, %136 : vector<2x8x32xf32>
    %138 = vector.shape_cast %6 : vector<1x32xf32> to vector<1x1x32xf32>
    %139 = vector.broadcast %138 : vector<1x1x32xf32> to vector<2x8x32xf32>
    %140 = arith.mulf %139, %137 : vector<2x8x32xf32>
    %141 = vector.shape_cast %7 : vector<1x32xf32> to vector<1x1x32xf32>
    %142 = vector.broadcast %141 : vector<1x1x32xf32> to vector<2x8x32xf32>
    %143 = arith.addf %140, %142 : vector<2x8x32xf32>
    %144 = vector.shape_cast %143 : vector<2x8x32xf32> to vector<16x32xf32>
    %145 = arith.truncf %144 : vector<16x32xf32> to vector<16x32xbf16>
    %cst_66 = arith.constant dense<0.000000e+00> : vector<16x32xf32>
    %146 = tpu.matmul %145, %8, %cst_66 {dimension_numbers = #tpu.dot_dimension_numbers<[1], [0], [0], [1], [0, 0, 1, 1], [], []>} : vector<16x32xbf16>, vector<32x32xbf16>, vector<16x32xf32> -> vector<16x32xf32>
    %147 = vector.broadcast %9 : vector<1x32xf32> to vector<16x32xf32>
    %148 = arith.addf %146, %147 : vector<16x32xf32>
    %149 = vector.shape_cast %148 : vector<16x32xf32> to vector<2x8x32xf32>
    %150 = vector.extract_strided_slice %149 {offsets = [0, 0, 0], sizes = [2, 8, 8], strides = [1, 1, 1]} : vector<2x8x32xf32> to vector<2x8x8xf32>
    %151 = vector.extract_strided_slice %149 {offsets = [0, 0, 8], sizes = [2, 8, 8], strides = [1, 1, 1]} : vector<2x8x32xf32> to vector<2x8x8xf32>
    %152 = vector.extract_strided_slice %149 {offsets = [0, 0, 16], sizes = [2, 8, 8], strides = [1, 1, 1]} : vector<2x8x32xf32> to vector<2x8x8xf32>
    %153 = vector.extract_strided_slice %149 {offsets = [0, 0, 24], sizes = [2, 8, 8], strides = [1, 1, 1]} : vector<2x8x32xf32> to vector<2x8x8xf32>
    %154 = vector.shape_cast %150 : vector<2x8x8xf32> to vector<1x2x8x8xf32>
    %155 = vector.shape_cast %151 : vector<2x8x8xf32> to vector<1x2x8x8xf32>
    %156 = vector.shape_cast %152 : vector<2x8x8xf32> to vector<1x2x8x8xf32>
    %157 = vector.shape_cast %153 : vector<2x8x8xf32> to vector<1x2x8x8xf32>
    %158 = tpu.concatenate %154, %155, %156, %157 in 0 : vector<1x2x8x8xf32>, vector<1x2x8x8xf32>, vector<1x2x8x8xf32>, vector<1x2x8x8xf32> -> vector<4x2x8x8xf32>
    %159 = vector.shape_cast %158 : vector<4x2x8x8xf32> to vector<8x8x8xf32>
    %160 = arith.truncf %159 : vector<8x8x8xf32> to vector<8x8x8xbf16>
    %161 = vector.shape_cast %21 : vector<2x12x32xf32> to vector<24x32xf32>
    %162 = arith.truncf %161 : vector<24x32xf32> to vector<24x32xbf16>
    %cst_67 = arith.constant dense<0.000000e+00> : vector<24x64xf32>
    %163 = tpu.matmul %162, %10, %cst_67 {dimension_numbers = #tpu.dot_dimension_numbers<[1], [0], [0], [1], [0, 0, 1, 1], [], []>} : vector<24x32xbf16>, vector<32x64xbf16>, vector<24x64xf32> -> vector<24x64xf32>
    %164 = vector.broadcast %11 : vector<1x64xf32> to vector<24x64xf32>
    %165 = arith.addf %163, %164 : vector<24x64xf32>
    %166 = vector.shape_cast %165 : vector<24x64xf32> to vector<2x12x64xf32>
    %167 = vector.extract_strided_slice %166 {offsets = [0, 0, 0], sizes = [2, 12, 8], strides = [1, 1, 1]} : vector<2x12x64xf32> to vector<2x12x8xf32>
    %168 = vector.extract_strided_slice %166 {offsets = [0, 0, 8], sizes = [2, 12, 8], strides = [1, 1, 1]} : vector<2x12x64xf32> to vector<2x12x8xf32>
    %169 = vector.extract_strided_slice %166 {offsets = [0, 0, 16], sizes = [2, 12, 8], strides = [1, 1, 1]} : vector<2x12x64xf32> to vector<2x12x8xf32>
    %170 = vector.extract_strided_slice %166 {offsets = [0, 0, 24], sizes = [2, 12, 8], strides = [1, 1, 1]} : vector<2x12x64xf32> to vector<2x12x8xf32>
    %171 = vector.shape_cast %167 : vector<2x12x8xf32> to vector<1x2x12x8xf32>
    %172 = vector.shape_cast %168 : vector<2x12x8xf32> to vector<1x2x12x8xf32>
    %173 = vector.shape_cast %169 : vector<2x12x8xf32> to vector<1x2x12x8xf32>
    %174 = vector.shape_cast %170 : vector<2x12x8xf32> to vector<1x2x12x8xf32>
    %175 = tpu.concatenate %171, %172, %173, %174 in 0 : vector<1x2x12x8xf32>, vector<1x2x12x8xf32>, vector<1x2x12x8xf32>, vector<1x2x12x8xf32> -> vector<4x2x12x8xf32>
    %176 = vector.shape_cast %175 : vector<4x2x12x8xf32> to vector<8x12x8xf32>
    %177 = arith.truncf %176 : vector<8x12x8xf32> to vector<8x12x8xbf16>
    %178 = vector.extract_strided_slice %166 {offsets = [0, 0, 32], sizes = [2, 12, 8], strides = [1, 1, 1]} : vector<2x12x64xf32> to vector<2x12x8xf32>
    %179 = vector.extract_strided_slice %166 {offsets = [0, 0, 40], sizes = [2, 12, 8], strides = [1, 1, 1]} : vector<2x12x64xf32> to vector<2x12x8xf32>
    %180 = vector.extract_strided_slice %166 {offsets = [0, 0, 48], sizes = [2, 12, 8], strides = [1, 1, 1]} : vector<2x12x64xf32> to vector<2x12x8xf32>
    %181 = vector.extract_strided_slice %166 {offsets = [0, 0, 56], sizes = [2, 12, 8], strides = [1, 1, 1]} : vector<2x12x64xf32> to vector<2x12x8xf32>
    %182 = vector.shape_cast %178 : vector<2x12x8xf32> to vector<1x2x12x8xf32>
    %183 = vector.shape_cast %179 : vector<2x12x8xf32> to vector<1x2x12x8xf32>
    %184 = vector.shape_cast %180 : vector<2x12x8xf32> to vector<1x2x12x8xf32>
    %185 = vector.shape_cast %181 : vector<2x12x8xf32> to vector<1x2x12x8xf32>
    %186 = tpu.concatenate %182, %183, %184, %185 in 0 : vector<1x2x12x8xf32>, vector<1x2x12x8xf32>, vector<1x2x12x8xf32>, vector<1x2x12x8xf32> -> vector<4x2x12x8xf32>
    %187 = vector.shape_cast %186 : vector<4x2x12x8xf32> to vector<8x12x8xf32>
    %188 = arith.truncf %187 : vector<8x12x8xf32> to vector<8x12x8xbf16>
    "tpu.trace_start"() <{level = 10 : i32, message = "nqd,nkd->nqk"}> : () -> ()
    %cst_68 = arith.constant dense<0.000000e+00> : vector<8x8x12xf32>
    %189 = tpu.matmul %160, %177, %cst_68 {dimension_numbers = #tpu.dot_dimension_numbers<[2], [2], [1], [1], [0, 0, 0, 1, 1, 1], [0], [0]>} : vector<8x8x8xbf16>, vector<8x12x8xbf16>, vector<8x8x12xf32> -> vector<8x8x12xf32>
    "tpu.trace_stop"() : () -> ()
    %190 = vector.shape_cast %23 : vector<2x1x12xf32> to vector<1x2x1x12xf32>
    %191 = vector.shape_cast %190 : vector<1x2x1x12xf32> to vector<1x2x1x12xf32>
    %192 = vector.broadcast %191 : vector<1x2x1x12xf32> to vector<4x2x1x12xf32>
    %193 = vector.shape_cast %192 : vector<4x2x1x12xf32> to vector<8x1x12xf32>
    %194 = vector.broadcast %193 : vector<8x1x12xf32> to vector<8x8x12xf32>
    %195 = arith.addf %189, %194 : vector<8x8x12xf32>
    %cst_69 = arith.constant dense<0xFF800000> : vector<8x8xf32>
    %196 = vector.multi_reduction <maximumf>, %195, %cst_69 [2] : vector<8x8x12xf32> to vector<8x8xf32>
    %197 = vector.shape_cast %196 : vector<8x8xf32> to vector<8x8x1xf32>
    %198 = vector.broadcast %197 : vector<8x8x1xf32> to vector<8x8x12xf32>
    %199 = arith.subf %195, %198 : vector<8x8x12xf32>
    %200 = math.exp %199 : vector<8x8x12xf32>
    %cst_70 = arith.constant dense<0.000000e+00> : vector<8x8xf32>
    %201 = vector.multi_reduction <add>, %200, %cst_70 [2] : vector<8x8x12xf32> to vector<8x8xf32>
    %202 = vector.shape_cast %201 : vector<8x8xf32> to vector<8x8x1xf32>
    %203 = tpu.reciprocal %202 {approx = true} : vector<8x8x1xf32> -> vector<8x8x1xf32>
    %204 = vector.broadcast %203 : vector<8x8x1xf32> to vector<8x8x12xf32>
    %205 = arith.mulf %200, %204 : vector<8x8x12xf32>
    %206 = arith.truncf %205 : vector<8x8x12xf32> to vector<8x8x12xbf16>
    "tpu.trace_start"() <{level = 10 : i32, message = "nqk,nkd->nqd"}> : () -> ()
    %cst_71 = arith.constant dense<0.000000e+00> : vector<8x8x8xf32>
    %207 = tpu.matmul %206, %188, %cst_71 {dimension_numbers = #tpu.dot_dimension_numbers<[2], [1], [1], [2], [0, 0, 0, 1, 1, 2], [0], [0]>} : vector<8x8x12xbf16>, vector<8x12x8xbf16>, vector<8x8x8xf32> -> vector<8x8x8xf32>
    "tpu.trace_stop"() : () -> ()
    %208 = vector.shape_cast %207 : vector<8x8x8xf32> to vector<4x2x8x8xf32>
    %209 = vector.extract_strided_slice %208 {offsets = [0, 0, 0, 0], sizes = [1, 2, 8, 8], strides = [1, 1, 1, 1]} : vector<4x2x8x8xf32> to vector<1x2x8x8xf32>
    %210 = vector.shape_cast %209 : vector<1x2x8x8xf32> to vector<2x8x8xf32>
    %211 = vector.extract_strided_slice %208 {offsets = [1, 0, 0, 0], sizes = [1, 2, 8, 8], strides = [1, 1, 1, 1]} : vector<4x2x8x8xf32> to vector<1x2x8x8xf32>
    %212 = vector.shape_cast %211 : vector<1x2x8x8xf32> to vector<2x8x8xf32>
    %213 = vector.extract_strided_slice %208 {offsets = [2, 0, 0, 0], sizes = [1, 2, 8, 8], strides = [1, 1, 1, 1]} : vector<4x2x8x8xf32> to vector<1x2x8x8xf32>
    %214 = vector.shape_cast %213 : vector<1x2x8x8xf32> to vector<2x8x8xf32>
    %215 = vector.extract_strided_slice %208 {offsets = [3, 0, 0, 0], sizes = [1, 2, 8, 8], strides = [1, 1, 1, 1]} : vector<4x2x8x8xf32> to vector<1x2x8x8xf32>
    %216 = vector.shape_cast %215 : vector<1x2x8x8xf32> to vector<2x8x8xf32>
    %217 = tpu.concatenate %210, %212, %214, %216 in 2 : vector<2x8x8xf32>, vector<2x8x8xf32>, vector<2x8x8xf32>, vector<2x8x8xf32> -> vector<2x8x32xf32>
    %218 = vector.shape_cast %217 : vector<2x8x32xf32> to vector<16x32xf32>
    %219 = arith.truncf %218 : vector<16x32xf32> to vector<16x32xbf16>
    %cst_72 = arith.constant dense<0.000000e+00> : vector<16x32xf32>
    %220 = tpu.matmul %219, %12, %cst_72 {dimension_numbers = #tpu.dot_dimension_numbers<[1], [0], [0], [1], [0, 0, 1, 1], [], []>} : vector<16x32xbf16>, vector<32x32xbf16>, vector<16x32xf32> -> vector<16x32xf32>
    %221 = vector.broadcast %13 : vector<1x32xf32> to vector<16x32xf32>
    %222 = arith.addf %220, %221 : vector<16x32xf32>
    %223 = vector.shape_cast %222 : vector<16x32xf32> to vector<2x8x32xf32>
    %224 = arith.addf %120, %223 : vector<2x8x32xf32>
    %cst_73 = arith.constant dense<0.000000e+00> : vector<2x8xf32>
    %225 = vector.multi_reduction <add>, %224, %cst_73 [2] : vector<2x8x32xf32> to vector<2x8xf32>
    %226 = vector.shape_cast %225 : vector<2x8xf32> to vector<2x8x1xf32>
    %cst_74 = arith.constant 3.200000e+01 : f32
    %227 = vector.broadcast %cst_74 : f32 to vector<2x8x1xf32>
    %228 = arith.divf %226, %227 : vector<2x8x1xf32>
    %229 = vector.broadcast %228 : vector<2x8x1xf32> to vector<2x8x32xf32>
    %230 = arith.subf %224, %229 : vector<2x8x32xf32>
    %231 = arith.mulf %230, %230 : vector<2x8x32xf32>
    %cst_75 = arith.constant dense<0.000000e+00> : vector<2x8xf32>
    %232 = vector.multi_reduction <add>, %231, %cst_75 [2] : vector<2x8x32xf32> to vector<2x8xf32>
    %233 = vector.shape_cast %232 : vector<2x8xf32> to vector<2x8x1xf32>
    %cst_76 = arith.constant 0.0322580636 : f32
    %234 = vector.broadcast %cst_76 : f32 to vector<2x8x1xf32>
    %235 = arith.mulf %233, %234 : vector<2x8x1xf32>
    %236 = math.sqrt %235 : vector<2x8x1xf32>
    %cst_77 = arith.constant 9.99999997E-7 : f32
    %237 = vector.broadcast %cst_77 : f32 to vector<2x8x1xf32>
    %238 = arith.addf %236, %237 : vector<2x8x1xf32>
    %239 = tpu.reciprocal %238 {approx = true} : vector<2x8x1xf32> -> vector<2x8x1xf32>
    %240 = vector.broadcast %239 : vector<2x8x1xf32> to vector<2x8x32xf32>
    %241 = arith.mulf %230, %240 : vector<2x8x32xf32>
    %242 = vector.shape_cast %14 : vector<1x32xf32> to vector<1x1x32xf32>
    %243 = vector.broadcast %242 : vector<1x1x32xf32> to vector<2x8x32xf32>
    %244 = arith.mulf %243, %241 : vector<2x8x32xf32>
    %245 = vector.shape_cast %15 : vector<1x32xf32> to vector<1x1x32xf32>
    %246 = vector.broadcast %245 : vector<1x1x32xf32> to vector<2x8x32xf32>
    %247 = arith.addf %244, %246 : vector<2x8x32xf32>
    %248 = vector.shape_cast %247 : vector<2x8x32xf32> to vector<16x32xf32>
    %249 = arith.truncf %248 : vector<16x32xf32> to vector<16x32xbf16>
    %cst_78 = arith.constant dense<0.000000e+00> : vector<16x64xf32>
    %250 = tpu.matmul %249, %16, %cst_78 {dimension_numbers = #tpu.dot_dimension_numbers<[1], [0], [0], [1], [0, 0, 1, 1], [], []>} : vector<16x32xbf16>, vector<32x64xbf16>, vector<16x64xf32> -> vector<16x64xf32>
    %251 = vector.broadcast %17 : vector<1x64xf32> to vector<16x64xf32>
    %252 = arith.addf %250, %251 : vector<16x64xf32>
    %253 = vector.shape_cast %252 : vector<16x64xf32> to vector<2x8x64xf32>
    %cst_79 = arith.constant 0.000000e+00 : f32
    %254 = vector.broadcast %cst_79 : f32 to vector<2x8x64xf32>
    %255 = arith.maximumf %253, %254 : vector<2x8x64xf32>
    %256 = vector.shape_cast %255 : vector<2x8x64xf32> to vector<16x64xf32>
    %257 = arith.truncf %256 : vector<16x64xf32> to vector<16x64xbf16>
    %cst_80 = arith.constant dense<0.000000e+00> : vector<16x32xf32>
    %258 = tpu.matmul %257, %18, %cst_80 {dimension_numbers = #tpu.dot_dimension_numbers<[1], [0], [0], [1], [0, 0, 1, 1], [], []>} : vector<16x64xbf16>, vector<64x32xbf16>, vector<16x32xf32> -> vector<16x32xf32>
    %259 = vector.broadcast %19 : vector<1x32xf32> to vector<16x32xf32>
    %260 = arith.addf %258, %259 : vector<16x32xf32>
    %261 = vector.shape_cast %260 : vector<16x32xf32> to vector<2x8x32xf32>
    %262 = arith.addf %224, %261 : vector<2x8x32xf32>
    %c0_81 = arith.constant 0 : index
    %c0_82 = arith.constant 0 : index
    %c0_83 = arith.constant 0 : index
    %263 = vector.load %arg24[%c0_81, %c0_82, %c0_83] : memref<2x8x32xf32, #tpu.memory_space<vmem>>, vector<2x8x32xf32>
    tpu.vector_store %arg24[%c0_81, %c0_82, %c0_83], %262 {strides = array<i32>} : memref<2x8x32xf32, #tpu.memory_space<vmem>>, vector<2x8x32xf32>,
    return
  }
}

</mosaic_0001>

<llo_original>
// kernel: tpu_custom_call.1
$region0: #{tpu_custom_call.1}
  #allocation0 [shape = 'u32[]', space=smem, size = 0x4, offset = 0x4, fixed_abs, tag = 'smem constant byte address 0x4 - core index']
  #allocation1 [shape = 'u32[72,128]{1,0:T(1,128)}', space=vmem, size = 0x9000, scoped, tag = 'internal scratch']
  %s0 = inlined_call_operand.vmem [shape: f32[2,8,32], index: 0, kind: input, shape index: {}]
  %s1 = inlined_call_operand.vmem [shape: f32[2,12,32], index: 1, kind: input, shape index: {}]
  %s2 = inlined_call_operand.vmem [shape: f32[2,8,8], index: 2, kind: input, shape index: {}]
  %s3 = inlined_call_operand.hbm [shape: f32[2,1,12], index: 3, kind: input, shape index: {}]
  %s4 = inlined_call_operand.vmem [shape: f32[1,32], index: 4, kind: input, shape index: {}]
  %s5 = inlined_call_operand.hbm [shape: f32[1,32], index: 5, kind: input, shape index: {}]
  %s6 = inlined_call_operand.vmem [shape: bf16[32,96], index: 6, kind: input, shape index: {}]
  %s7 = inlined_call_operand.hbm [shape: f32[1,96], index: 7, kind: input, shape index: {}]
  %s8 = inlined_call_operand.vmem [shape: bf16[32,32], index: 8, kind: input, shape index: {}]
  %s9 = inlined_call_operand.hbm [shape: f32[1,32], index: 9, kind: input, shape index: {}]
  %s10 = inlined_call_operand.hbm [shape: f32[1,32], index: 10, kind: input, shape index: {}]
  %s11 = inlined_call_operand.hbm [shape: f32[1,32], index: 11, kind: input, shape index: {}]
  %s12 = inlined_call_operand.vmem [shape: bf16[32,32], index: 12, kind: input, shape index: {}]
  %s13 = inlined_call_operand.vmem [shape: f32[1,32], index: 13, kind: input, shape index: {}]
  %s14 = inlined_call_operand.vmem [shape: bf16[32,64], index: 14, kind: input, shape index: {}]
  %s15 = inlined_call_operand.vmem [shape: f32[1,64], index: 15, kind: input, shape index: {}]
  %s16 = inlined_call_operand.hbm [shape: bf16[32,32], index: 16, kind: input, shape index: {}]
  %s17 = inlined_call_operand.vmem [shape: f32[1,32], index: 17, kind: input, shape index: {}]
  %s18 = inlined_call_operand.vmem [shape: f32[1,32], index: 18, kind: input, shape index: {}]
  %s19 = inlined_call_operand.vmem [shape: f32[1,32], index: 19, kind: input, shape index: {}]
  %s20 = inlined_call_operand.hbm [shape: bf16[32,64], index: 20, kind: input, shape index: {}]
  %s21 = inlined_call_operand.vmem [shape: f32[1,64], index: 21, kind: input, shape index: {}]
  %s22 = inlined_call_operand.vmem [shape: bf16[64,32], index: 22, kind: input, shape index: {}]
  %s23 = inlined_call_operand.vmem [shape: f32[1,32], index: 23, kind: input, shape index: {}]
  %s24 = inlined_call_operand.hbm [shape: f32[2,8,32], index: 24, kind: output, shape index: {}]
  %s25 = sld [smem:[#allocation0]]
  $region138: #{tpu_custom_call.1} parent=0
    _
  %s27 = ssub.s32 1, %s25
  %s28 = scalar_select 0, %s27, %s25
  $region1: #{tpu_custom_call.1} parent=0
    #allocation2 [shape = 'u8[1024]{0}', space=vmem, size = 0x400, scoped, tag = 'input window, operand 3, single buffered']
    #allocation3 [shape = 's32[1]{0}', space=sflag, size = 0x4, scoped, tag = 'scoped memory for tpu_custom_call.1']
    #allocation4 [shape = 's32[1]{0}', space=sflag, size = 0x4, scoped, tag = 'scoped memory for tpu_custom_call.1']
    #allocation5 [shape = 'u8[512]{0}', space=vmem, size = 0x400, scoped, tag = 'input window, operand 5, single buffered']
    #allocation6 [shape = 's32[1]{0}', space=sflag, size = 0x4, scoped, tag = 'scoped memory for tpu_custom_call.1']
    #allocation7 [shape = 'u8[512]{0}', space=vmem, size = 0x400, scoped, tag = 'input window, operand 7, single buffered']
    #allocation8 [shape = 'u8[512]{0}', space=vmem, size = 0x400, scoped, tag = 'input window, operand 9, single buffered']
    #allocation9 [shape = 's32[1]{0}', space=sflag, size = 0x4, scoped, tag = 'scoped memory for tpu_custom_call.1']
    #allocation10 [shape = 'u8[512]{0}', space=vmem, size = 0x400, scoped, tag = 'input window, operand 10, single buffered']
    #allocation11 [shape = 'u8[512]{0}', space=vmem, size = 0x400, scoped, tag = 'input window, operand 11, single buffered']
    #allocation12 [shape = 's32[1]{0}', space=sflag, size = 0x4, scoped, tag = 'scoped memory for tpu_custom_call.1']
    #allocation13 [shape = 'u8[8192]{0}', space=vmem, size = 0x2000, scoped, tag = 'input window, operand 16, single buffered']
    #allocation14 [shape = 'u8[8192]{0}', space=vmem, size = 0x2000, scoped, tag = 'input window, operand 20, single buffered']
    #allocation15 [shape = 's32[1]{0}', space=sflag, size = 0x4, scoped, tag = 'scoped memory for tpu_custom_call.1']
    #allocation16 [shape = 'u8[8192]{0}', space=vmem, size = 0x2000, scoped, tag = 'output window, operand 0, single buffered']
    %29 = vsyncpa [#allocation3], 0
    %30 = vsyncpa [#allocation6], 0
    %31 = vsyncpa [#allocation9], 0
    %32 = vsyncpa [#allocation12], 0
    %33 = vsyncpa [#allocation15], 0
    %34 = vsyncpa [#allocation4], 0
    // Predicated region
    $region2: #{tpu_custom_call.1} parent=1 // pred_check
      _
    $region3: #{tpu_custom_call.1} parent=1 // pred_check_branch
      %36 = sbr.rel (0) target = $region5
    $region4: #{tpu_custom_call.1} parent=1 // pred_region
      _
    $region5: #{tpu_custom_call.1} parent=1 // pred_fallthru
      _
    // Predicated region
    $region6: #{tpu_custom_call.1} parent=1 // pred_check
      _
    $region7: #{tpu_custom_call.1} parent=1 // pred_check_branch
      %38 = sbr.rel (0) target = $region9
    $region8: #{tpu_custom_call.1} parent=1 // pred_region
      _
    $region9: #{tpu_custom_call.1} parent=1 // pred_fallthru
      _
    // Predicated region
    $region10: #{tpu_custom_call.1} parent=1 // pred_check
      _
    $region11: #{tpu_custom_call.1} parent=1 // pred_check_branch
      %40 = sbr.rel (0) target = $region13
    $region12: #{tpu_custom_call.1} parent=1 // pred_region
      _
    $region13: #{tpu_custom_call.1} parent=1 // pred_fallthru
      _
    // Predicated region
    $region14: #{tpu_custom_call.1} parent=1 // pred_check
      _
    $region15: #{tpu_custom_call.1} parent=1 // pred_check_branch
      %42 = sbr.rel (0) target = $region17
    $region16: #{tpu_custom_call.1} parent=1 // pred_region
      %44 = vsyncadd [#allocation3], 0
      %s45 = sshll.u32 %s3, 4
      %s46 = int_to_ptr.hbm [resolvable:$true] %s45
      %s47 = sshll.u32 [#allocation2], 4
      %s48 = int_to_ptr.vmem [resolvable:$true] %s47
      %53 = dma.hbm_to_vmem [thread:$0]  %s46, 32, %s48, [#allocation3], 16, 16, 1
    $region17: #{tpu_custom_call.1} parent=1 // pred_fallthru
      _
    // Predicated region
    $region18: #{tpu_custom_call.1} parent=1 // pred_check
      _
    $region19: #{tpu_custom_call.1} parent=1 // pred_check_branch
      %55 = sbr.rel (0) target = $region21
    $region20: #{tpu_custom_call.1} parent=1 // pred_region
      _
    $region21: #{tpu_custom_call.1} parent=1 // pred_fallthru
      _
    // Predicated region
    $region22: #{tpu_custom_call.1} parent=1 // pred_check
      _
    $region23: #{tpu_custom_call.1} parent=1 // pred_check_branch
      %57 = sbr.rel (0) target = $region25
    $region24: #{tpu_custom_call.1} parent=1 // pred_region
      %59 = vsyncadd [#allocation6], 0
      %s61 = sshll.u32 %s5, 4
      %s62 = int_to_ptr.hbm [resolvable:$true] %s61
      %s63 = sshll.u32 [#allocation5], 4
      %s64 = int_to_ptr.vmem [resolvable:$true] %s63
      %66 = dma.hbm_to_vmem [thread:$0]  %s62, 16, %s64, [#allocation6]
    $region25: #{tpu_custom_call.1} parent=1 // pred_fallthru
      _
    // Predicated region
    $region26: #{tpu_custom_call.1} parent=1 // pred_check
      _
    $region27: #{tpu_custom_call.1} parent=1 // pred_check_branch
      %68 = sbr.rel (0) target = $region29
    $region28: #{tpu_custom_call.1} parent=1 // pred_region
      _
    $region29: #{tpu_custom_call.1} parent=1 // pred_fallthru
      _
    // Predicated region
    $region30: #{tpu_custom_call.1} parent=1 // pred_check
      _
    $region31: #{tpu_custom_call.1} parent=1 // pred_check_branch
      %70 = sbr.rel (0) target = $region33
    $region32: #{tpu_custom_call.1} parent=1 // pred_region
      %72 = vsyncadd [#allocation6], 0
      %s74 = sshll.u32 %s7, 4
      %s75 = int_to_ptr.hbm [resolvable:$true] %s74
      %s76 = sshll.u32 [#allocation7], 4
      %s77 = int_to_ptr.vmem [resolvable:$true] %s76
      %79 = dma.hbm_to_vmem [thread:$0]  %s75, 16, %s77, [#allocation6]
    $region33: #{tpu_custom_call.1} parent=1 // pred_fallthru
      _
    // Predicated region
    $region34: #{tpu_custom_call.1} parent=1 // pred_check
      _
    $region35: #{tpu_custom_call.1} parent=1 // pred_check_branch
      %81 = sbr.rel (0) target = $region37
    $region36: #{tpu_custom_call.1} parent=1 // pred_region
      _
    $region37: #{tpu_custom_call.1} parent=1 // pred_fallthru
      _
    // Predicated region
    $region38: #{tpu_custom_call.1} parent=1 // pred_check
      _
    $region39: #{tpu_custom_call.1} parent=1 // pred_check_branch
      %83 = sbr.rel (0) target = $region41
    $region40: #{tpu_custom_call.1} parent=1 // pred_region
      %85 = vsyncadd [#allocation9], 0
      %s87 = sshll.u32 %s9, 4
      %s88 = int_to_ptr.hbm [resolvable:$true] %s87
      %s89 = sshll.u32 [#allocation8], 4
      %s90 = int_to_ptr.vmem [resolvable:$true] %s89
      %92 = dma.hbm_to_vmem [thread:$0]  %s88, 16, %s90, [#allocation9]
    $region41: #{tpu_custom_call.1} parent=1 // pred_fallthru
      _
    // Predicated region
    $region42: #{tpu_custom_call.1} parent=1 // pred_check
      _
    $region43: #{tpu_custom_call.1} parent=1 // pred_check_branch
      %94 = sbr.rel (0) target = $region45
    $region44: #{tpu_custom_call.1} parent=1 // pred_region
      %96 = vsyncadd [#allocation9], 0
      %s98 = sshll.u32 %s10, 4
      %s99 = int_to_ptr.hbm [resolvable:$true] %s98
      %s100 = sshll.u32 [#allocation10], 4
      %s101 = int_to_ptr.vmem [resolvable:$true] %s100
      %103 = dma.hbm_to_vmem [thread:$0]  %s99, 16, %s101, [#allocation9]
    $region45: #{tpu_custom_call.1} parent=1 // pred_fallthru
      _
    // Predicated region
    $region46: #{tpu_custom_call.1} parent=1 // pred_check
      _
    $region47: #{tpu_custom_call.1} parent=1 // pred_check_branch
      %105 = sbr.rel (0) target = $region49
    $region48: #{tpu_custom_call.1} parent=1 // pred_region
      %107 = vsyncadd [#allocation12], 0
      %s109 = sshll.u32 %s11, 4
      %s110 = int_to_ptr.hbm [resolvable:$true] %s109
      %s111 = sshll.u32 [#allocation11], 4
      %s112 = int_to_ptr.vmem [resolvable:$true] %s111
      %114 = dma.hbm_to_vmem [thread:$0]  %s110, 16, %s112, [#allocation12]
    $region49: #{tpu_custom_call.1} parent=1 // pred_fallthru
      _
    // Predicated region
    $region50: #{tpu_custom_call.1} parent=1 // pred_check
      _
    $region51: #{tpu_custom_call.1} parent=1 // pred_check_branch
      %116 = sbr.rel (0) target = $region53
    $region52: #{tpu_custom_call.1} parent=1 // pred_region
      _
    $region53: #{tpu_custom_call.1} parent=1 // pred_fallthru
      _
    // Predicated region
    $region54: #{tpu_custom_call.1} parent=1 // pred_check
      _
    $region55: #{tpu_custom_call.1} parent=1 // pred_check_branch
      %118 = sbr.rel (0) target = $region57
    $region56: #{tpu_custom_call.1} parent=1 // pred_region
      _
    $region57: #{tpu_custom_call.1} parent=1 // pred_fallthru
      _
    // Predicated region
    $region58: #{tpu_custom_call.1} parent=1 // pred_check
      _
    $region59: #{tpu_custom_call.1} parent=1 // pred_check_branch
      %120 = sbr.rel (0) target = $region61
    $region60: #{tpu_custom_call.1} parent=1 // pred_region
      _
    $region61: #{tpu_custom_call.1} parent=1 // pred_fallthru
      _
    // Predicated region
    $region62: #{tpu_custom_call.1} parent=1 // pred_check
      _
    $region63: #{tpu_custom_call.1} parent=1 // pred_check_branch
      %122 = sbr.rel (0) target = $region65
    $region64: #{tpu_custom_call.1} parent=1 // pred_region
      _
    $region65: #{tpu_custom_call.1} parent=1 // pred_fallthru
      _
    // Predicated region
    $region66: #{tpu_custom_call.1} parent=1 // pred_check
      _
    $region67: #{tpu_custom_call.1} parent=1 // pred_check_branch
      %124 = sbr.rel (0) target = $region69
    $region68: #{tpu_custom_call.1} parent=1 // pred_region
      %126 = vsyncadd [#allocation12], 0
      %s127 = sshll.u32 %s16, 4
      %s128 = int_to_ptr.hbm [resolvable:$true] %s127
      %s129 = sshll.u32 [#allocation13], 4
      %s130 = int_to_ptr.vmem [resolvable:$true] %s129
      %135 = dma.hbm_to_vmem [thread:$0]  %s128, 256, %s130, [#allocation12], 64, 64, 4
    $region69: #{tpu_custom_call.1} parent=1 // pred_fallthru
      _
    // Predicated region
    $region70: #{tpu_custom_call.1} parent=1 // pred_check
      _
    $region71: #{tpu_custom_call.1} parent=1 // pred_check_branch
      %137 = sbr.rel (0) target = $region73
    $region72: #{tpu_custom_call.1} parent=1 // pred_region
      _
    $region73: #{tpu_custom_call.1} parent=1 // pred_fallthru
      _
    // Predicated region
    $region74: #{tpu_custom_call.1} parent=1 // pred_check
      _
    $region75: #{tpu_custom_call.1} parent=1 // pred_check_branch
      %139 = sbr.rel (0) target = $region77
    $region76: #{tpu_custom_call.1} parent=1 // pred_region
      _
    $region77: #{tpu_custom_call.1} parent=1 // pred_fallthru
      _
    // Predicated region
    $region78: #{tpu_custom_call.1} parent=1 // pred_check
      _
    $region79: #{tpu_custom_call.1} parent=1 // pred_check_branch
      %141 = sbr.rel (0) target = $region81
    $region80: #{tpu_custom_call.1} parent=1 // pred_region
      _
    $region81: #{tpu_custom_call.1} parent=1 // pred_fallthru
      _
    // Predicated region
    $region82: #{tpu_custom_call.1} parent=1 // pred_check
      _
    $region83: #{tpu_custom_call.1} parent=1 // pred_check_branch
      %143 = sbr.rel (0) target = $region85
    $region84: #{tpu_custom_call.1} parent=1 // pred_region
      %145 = vsyncadd [#allocation15], 0
      %s146 = sshll.u32 %s20, 4
      %s147 = int_to_ptr.hbm [resolvable:$true] %s146
      %s148 = sshll.u32 [#allocation14], 4
      %s149 = int_to_ptr.vmem [resolvable:$true] %s148
      %154 = dma.hbm_to_vmem [thread:$0]  %s147, 256, %s149, [#allocation15], 64, 64, 4
    $region85: #{tpu_custom_call.1} parent=1 // pred_fallthru
      _
    // Predicated region
    $region86: #{tpu_custom_call.1} parent=1 // pred_check
      _
    $region87: #{tpu_custom_call.1} parent=1 // pred_check_branch
      %156 = sbr.rel (0) target = $region89
    $region88: #{tpu_custom_call.1} parent=1 // pred_region
      _
    $region89: #{tpu_custom_call.1} parent=1 // pred_fallthru
      _
    // Predicated region
    $region90: #{tpu_custom_call.1} parent=1 // pred_check
      _
    $region91: #{tpu_custom_call.1} parent=1 // pred_check_branch
      %158 = sbr.rel (0) target = $region93
    $region92: #{tpu_custom_call.1} parent=1 // pred_region
      _
    $region93: #{tpu_custom_call.1} parent=1 // pred_fallthru
      _
    // Predicated region
    $region94: #{tpu_custom_call.1} parent=1 // pred_check
      _
    $region95: #{tpu_custom_call.1} parent=1 // pred_check_branch
      %160 = sbr.rel (0) target = $region97
    $region96: #{tpu_custom_call.1} parent=1 // pred_region
      _
    $region97: #{tpu_custom_call.1} parent=1 // pred_fallthru
      _
    // Predicated region
    $region98: #{tpu_custom_call.1} parent=1 // pred_check
      _
    $region99: #{tpu_custom_call.1} parent=1 // pred_check_branch
      %162 = sbr.rel (0) target = $region101
    $region100: #{tpu_custom_call.1} parent=1 // pred_region
      %164 = dma.done [#allocation3], 32
    $region101: #{tpu_custom_call.1} parent=1 // pred_fallthru
      _
    // Predicated region
    $region102: #{tpu_custom_call.1} parent=1 // pred_check
      _
    $region103: #{tpu_custom_call.1} parent=1 // pred_check_branch
      %166 = sbr.rel (0) target = $region105
    $region104: #{tpu_custom_call.1} parent=1 // pred_region
      %168 = dma.done [#allocation6], 16
    $region105: #{tpu_custom_call.1} parent=1 // pred_fallthru
      _
    // Predicated region
    $region106: #{tpu_custom_call.1} parent=1 // pred_check
      _
    $region107: #{tpu_custom_call.1} parent=1 // pred_check_branch
      %170 = sbr.rel (0) target = $region109
    $region108: #{tpu_custom_call.1} parent=1 // pred_region
      %172 = dma.done [#allocation6], 16
    $region109: #{tpu_custom_call.1} parent=1 // pred_fallthru
      _
    // Predicated region
    $region110: #{tpu_custom_call.1} parent=1 // pred_check
      _
    $region111: #{tpu_custom_call.1} parent=1 // pred_check_branch
      %174 = sbr.rel (0) target = $region113
    $region112: #{tpu_custom_call.1} parent=1 // pred_region
      %176 = dma.done [#allocation9], 16
    $region113: #{tpu_custom_call.1} parent=1 // pred_fallthru
      _
    // Predicated region
    $region114: #{tpu_custom_call.1} parent=1 // pred_check
      _
    $region115: #{tpu_custom_call.1} parent=1 // pred_check_branch
      %178 = sbr.rel (0) target = $region117
    $region116: #{tpu_custom_call.1} parent=1 // pred_region
      %180 = dma.done [#allocation9], 16
    $region117: #{tpu_custom_call.1} parent=1 // pred_fallthru
      _
    // Predicated region
    $region118: #{tpu_custom_call.1} parent=1 // pred_check
      _
    $region119: #{tpu_custom_call.1} parent=1 // pred_check_branch
      %182 = sbr.rel (0) target = $region121
    $region120: #{tpu_custom_call.1} parent=1 // pred_region
      %184 = dma.done [#allocation12], 16
    $region121: #{tpu_custom_call.1} parent=1 // pred_fallthru
      _
    // Predicated region
    $region122: #{tpu_custom_call.1} parent=1 // pred_check
      _
    $region123: #{tpu_custom_call.1} parent=1 // pred_check_branch
      %186 = sbr.rel (0) target = $region125
    $region124: #{tpu_custom_call.1} parent=1 // pred_region
      %188 = dma.done [#allocation12], 256
    $region125: #{tpu_custom_call.1} parent=1 // pred_fallthru
      _
    // Predicated region
    $region126: #{tpu_custom_call.1} parent=1 // pred_check
      _
    $region127: #{tpu_custom_call.1} parent=1 // pred_check_branch
      %190 = sbr.rel (0) target = $region129
    $region128: #{tpu_custom_call.1} parent=1 // pred_region
      %192 = dma.done [#allocation15], 256
    $region129: #{tpu_custom_call.1} parent=1 // pred_fallthru
      _
    %v194 = vld [vmem:[%s4] sm:$0x1]
    %v195 = vld [vmem:[#allocation5] sm:$0x1]
    %v196 = vld [vmem:[%s6] sm:$0xf]
    %v197 = vld [vmem:[%s6 + $0x4] sm:$0xf]
    %v198 = vld [vmem:[%s6 + $0x8] sm:$0xf]
    %v199 = vld [vmem:[%s6 + $0xc] sm:$0xf]
    %v200 = vld [vmem:[#allocation7] sm:$0x1]
    %v201 = vld [vmem:[%s8] sm:$0xf]
    %v202 = vld [vmem:[%s8 + $0x4] sm:$0xf]
    %v203 = vld [vmem:[%s8 + $0x8] sm:$0xf]
    %v204 = vld [vmem:[%s8 + $0xc] sm:$0xf]
    %v205 = vld [vmem:[#allocation8] sm:$0x1]
    %v206 = vld [vmem:[#allocation10] sm:$0x1]
    %v207 = vld [vmem:[#allocation11] sm:$0x1]
    %v208 = vld [vmem:[%s12] sm:$0xf]
    %v209 = vld [vmem:[%s12 + $0x4] sm:$0xf]
    %v210 = vld [vmem:[%s12 + $0x8] sm:$0xf]
    %v211 = vld [vmem:[%s12 + $0xc] sm:$0xf]
    %v212 = vld [vmem:[%s13] sm:$0x1]
    %v213 = vld [vmem:[%s14] sm:$0xf]
    %v214 = vld [vmem:[%s14 + $0x4] sm:$0xf]
    %v215 = vld [vmem:[%s14 + $0x8] sm:$0xf]
    %v216 = vld [vmem:[%s14 + $0xc] sm:$0xf]
    %v217 = vld [vmem:[%s15] sm:$0x1]
    %v218 = vld [vmem:[#allocation13] sm:$0xf]
    %v219 = vld [vmem:[#allocation13 + $0x4] sm:$0xf]
    %v220 = vld [vmem:[#allocation13 + $0x8] sm:$0xf]
    %v221 = vld [vmem:[#allocation13 + $0xc] sm:$0xf]
    %v222 = vld [vmem:[%s17] sm:$0x1]
    %v223 = vld [vmem:[%s18] sm:$0x1]
    %v224 = vld [vmem:[%s19] sm:$0x1]
    %v225 = vld [vmem:[#allocation14] sm:$0xf]
    %v226 = vld [vmem:[#allocation14 + $0x4] sm:$0xf]
    %v227 = vld [vmem:[#allocation14 + $0x8] sm:$0xf]
    %v228 = vld [vmem:[#allocation14 + $0xc] sm:$0xf]
    %v229 = vld [vmem:[%s21] sm:$0x1]
    %v230 = vld [vmem:[%s22] sm:$0xf]
    %v231 = vld [vmem:[%s22 + $0x4] sm:$0xf]
    %v232 = vld [vmem:[%s22 + $0x8] sm:$0xf]
    %v233 = vld [vmem:[%s22 + $0xc] sm:$0xf]
    %v234 = vld [vmem:[%s22 + $0x10] sm:$0xf]
    %v235 = vld [vmem:[%s22 + $0x14] sm:$0xf]
    %v236 = vld [vmem:[%s22 + $0x18] sm:$0xf]
    %v237 = vld [vmem:[%s22 + $0x1c] sm:$0xf]
    %v238 = vld [vmem:[%s23] sm:$0x1]
    %v239 = vld [vmem:[%s0] sm:$0xff]
    %v240 = vld [vmem:[%s0 + $0x8] sm:$0xff]
    %v241 = vld [vmem:[%s1] sm:$0xff]
    %v242 = vld [vmem:[%s1 + $0x8] sm:$0xf]
    %v243 = vld [vmem:[%s1 + $0x10] sm:$0xff]
    %v244 = vld [vmem:[%s1 + $0x18] sm:$0xf]
    %v245 = vld [vmem:[%s2] sm:$0xff]
    %v246 = vld [vmem:[%s2 + $0x8] sm:$0xff]
    %v247 = vld [vmem:[#allocation2] sm:$0x1]
    %v248 = vld [vmem:[#allocation2 + $0x1] sm:$0x1]
    %vm249 = vcmask 261120
    %v250 = vsel %vm249, %v239, 0.0
    %251 = vadd.xlane.f32.xlu0 %v250
    %v252 = vpop.xlane.xlu0 %251
    %v253 = vsel %vm249, %v240, 0.0
    %254 = vadd.xlane.f32.xlu0 %v253
    %v255 = vpop.xlane.xlu0 %254
    %v256 = vrcp.pop 32.0
    %v257 = vmul.f32 32.0, %v256
    %v258 = vsub.f32 1.0, %v257
    %v259 = vmul.f32 %v256, %v258
    %v260 = vadd.f32 %v256, %v259
    %vm261 = vweird.f32 %v256
    %v262 = vsel %vm261, %v256, %v260
    %v263 = vmul.f32 %v252, %v262
    %v264 = vmul.f32 %v255, %v262
    %v265 = vsub.f32 %v239, %v263
    %v266 = vsub.f32 %v240, %v264
    %v267 = vmul.f32 %v265, %v265
    %v268 = vmul.f32 %v266, %v266
    %v269 = vsel %vm249, %v267, 0.0
    %270 = vadd.xlane.f32.xlu0 %v269
    %v271 = vpop.xlane.xlu0 %270
    %v272 = vsel %vm249, %v268, 0.0
    %273 = vadd.xlane.f32.xlu0 %v272
    %v274 = vpop.xlane.xlu0 %273
    %v275 = vmul.f32 %v271, 0.032258064
    %v276 = vmul.f32 %v274, 0.032258064
    %v277 = vrsqrt.pop %v275
    %v278 = vmul.f32 %v277, %v275
    %v279 = vmul.f32 %v278, %v277
    %v280 = vmul.f32 0.5, %v279
    %v281 = vsub.f32 1.5, %v280
    %v282 = vmul.f32 %v277, %v281
    %v283 = vmul.f32 %v275, %v282
    %vm284 = vcmp.eq.f32.partialorder %v275, inf
    %v285 = vsel %vm284, %v275, %v283
    %vm286 = vcmp.eq.f32.partialorder %v275, 0.0
    %v287 = vand.u32 %v275, 2147483648
    %v288 = vsel %vm286, %v287, %v285
    %v289 = vrsqrt.pop %v276
    %v290 = vmul.f32 %v289, %v276
    %v291 = vmul.f32 %v290, %v289
    %v292 = vmul.f32 0.5, %v291
    %v293 = vsub.f32 1.5, %v292
    %v294 = vmul.f32 %v289, %v293
    %v295 = vmul.f32 %v276, %v294
    %vm296 = vcmp.eq.f32.partialorder %v276, inf
    %v297 = vsel %vm296, %v276, %v295
    %vm298 = vcmp.eq.f32.partialorder %v276, 0.0
    %v299 = vand.u32 %v276, 2147483648
    %v300 = vsel %vm298, %v299, %v297
    %v301 = vadd.f32 %v288, 1e-06
    %v302 = vadd.f32 %v300, 1e-06
    %v303 = vrcp.pop %v301
    %v304 = vrcp.pop %v302
    %v305 = vmul.f32 %v265, %v303
    %v306 = vmul.f32 %v266, %v304
    %v308 = vperm.slane %v194, 0
    %v310 = vmul.f32 %v308, %v305
    %v311 = vmul.f32 %v308, %v306
    %v313 = vperm.slane %v195, 0
    %v315 = vadd.f32 %v310, %v313
    %v316 = vadd.f32 %v311, %v313
    %v317 = vpack.c.bf16 %v316, %v315
    %v319 = vperm.slane %v200, 0
    %v325 = vunpack.c.l.b16 %v196
    %v326 = vunpack.c.l.b16 %v197
    %v327 = vunpack.c.l.b16 %v198
    %v328 = vunpack.c.l.b16 %v199
    %v329 = vpack.c.b16 %v326, %v325
    %v330 = vpack.c.b16 %v328, %v327
    %v334 = vsel %vm249, %v317, 0
    %336 = vmatpush.bf16.msra.mxu0 0
    %337 = vmatpush.bf16.msra.mxu0 0
    %338 = vmatpush.bf16.msra.mxu0 0
    %339 = vmatpush.bf16.msra.mxu0 0
    %340 = vmatpush.bf16.msra.mxu0 0
    %341 = vmatpush.bf16.msra.mxu0 0
    %342 = vmatpush.bf16.msra.mxu0 %v330
    %343 = vmatpush.bf16.msra.mxu0 %v329
    %344 = vmatmul.bf16.gmra.mxu0 %v334
    %v345 = vpop.f32.mrf.mxu0
    %v346 = vadd.f32 %v319, %v345
    %v347 = vpop.f32.mrf.mxu0
    %v348 = vadd.f32 %v319, %v347
    %349 = vdwg.mxu0
    %352 = vrot.lane.b32.xlu0 %v346, 120
    %v353 = vpop.permute.xlu0 %352
    %354 = vrot.lane.b32.xlu0 %v348, 120
    %v355 = vpop.permute.xlu0 %354
    %358 = vrot.lane.b32.xlu0 %v346, 112
    %v359 = vpop.permute.xlu0 %358
    %360 = vrot.lane.b32.xlu0 %v348, 112
    %v361 = vpop.permute.xlu0 %360
    %364 = vrot.lane.b32.xlu0 %v346, 104
    %v365 = vpop.permute.xlu0 %364
    %366 = vrot.lane.b32.xlu0 %v348, 104
    %v367 = vpop.permute.xlu0 %366
    %v370 = vpack.c.bf16 %v346, %v346
    %v371 = vpack.c.bf16 %v348, %v348
    %v372 = vpack.c.bf16 %v353, %v353
    %v373 = vpack.c.bf16 %v355, %v355
    %v374 = vpack.c.bf16 %v359, %v359
    %v375 = vpack.c.bf16 %v361, %v361
    %v376 = vpack.c.bf16 %v365, %v365
    %v377 = vpack.c.bf16 %v367, %v367
    %v379 = vunpack.c.l.b16 %v370
    %v380 = vpack.c.b16 %v379, %v379
    %381 = vrot.lane.b32.xlu0 %v380, 96
    %v382 = vpop.permute.xlu0 %381
    %vm383 = vcmask 64512
    %v385 = vsel %vm383, %v370, 0
    %v388 = vsel %vm383, %v382, 0
    %390 = vmatpush.bf16.xpose.msra.mxu0 0
    %391 = vmatpush.bf16.xpose.msra.mxu0 0
    %392 = vmatpush.bf16.xpose.msra.mxu0 0
    %393 = vmatpush.bf16.xpose.msra.mxu0 0
    %394 = vmatpush.bf16.xpose.msra.mxu0 0
    %395 = vmatpush.bf16.xpose.msra.mxu0 0
    %396 = vmatpush.bf16.xpose.msra.mxu0 0
    %397 = vmatpush.bf16.xpose.msra.mxu0 %v388
    %398 = vmatmul.bf16.gmra.mxu0 %v385
    %v399 = vpop.f32.mrf.mxu0
    %v400 = vadd.f32 %v245, %v399
    %v401 = vpop.f32.mrf.mxu0
    %402 = vdwg.mxu0
    %v404 = vunpack.c.l.b16 %v371
    %v405 = vpack.c.b16 %v404, %v404
    %406 = vrot.lane.b32.xlu0 %v405, 96
    %v407 = vpop.permute.xlu0 %406
    %v409 = vsel %vm383, %v371, 0
    %v412 = vsel %vm383, %v407, 0
    %414 = vmatpush.bf16.xpose.msra.mxu0 0
    %415 = vmatpush.bf16.xpose.msra.mxu0 0
    %416 = vmatpush.bf16.xpose.msra.mxu0 0
    %417 = vmatpush.bf16.xpose.msra.mxu0 0
    %418 = vmatpush.bf16.xpose.msra.mxu0 0
    %419 = vmatpush.bf16.xpose.msra.mxu0 0
    %420 = vmatpush.bf16.xpose.msra.mxu0 0
    %421 = vmatpush.bf16.xpose.msra.mxu0 %v412
    %422 = vmatmul.bf16.gmra.mxu0 %v409
    %v423 = vpop.f32.mrf.mxu0
    %v424 = vadd.f32 %v246, %v423
    %v425 = vpop.f32.mrf.mxu0
    %426 = vdwg.mxu0
    %v428 = vunpack.c.l.b16 %v372
    %v429 = vpack.c.b16 %v428, %v428
    %430 = vrot.lane.b32.xlu0 %v429, 96
    %v431 = vpop.permute.xlu0 %430
    %v433 = vsel %vm383, %v372, 0
    %v436 = vsel %vm383, %v431, 0
    %438 = vmatpush.bf16.xpose.msra.mxu0 0
    %439 = vmatpush.bf16.xpose.msra.mxu0 0
    %440 = vmatpush.bf16.xpose.msra.mxu0 0
    %441 = vmatpush.bf16.xpose.msra.mxu0 0
    %442 = vmatpush.bf16.xpose.msra.mxu0 0
    %443 = vmatpush.bf16.xpose.msra.mxu0 0
    %444 = vmatpush.bf16.xpose.msra.mxu0 0
    %445 = vmatpush.bf16.xpose.msra.mxu0 %v436
    %446 = vmatmul.bf16.gmra.mxu0 %v433
    %v447 = vpop.f32.mrf.mxu0
    %v448 = vadd.f32 %v245, %v447
    %v449 = vpop.f32.mrf.mxu0
    %450 = vdwg.mxu0
    %v452 = vunpack.c.l.b16 %v373
    %v453 = vpack.c.b16 %v452, %v452
    %454 = vrot.lane.b32.xlu0 %v453, 96
    %v455 = vpop.permute.xlu0 %454
    %v457 = vsel %vm383, %v373, 0
    %v460 = vsel %vm383, %v455, 0
    %462 = vmatpush.bf16.xpose.msra.mxu0 0
    %463 = vmatpush.bf16.xpose.msra.mxu0 0
    %464 = vmatpush.bf16.xpose.msra.mxu0 0
    %465 = vmatpush.bf16.xpose.msra.mxu0 0
    %466 = vmatpush.bf16.xpose.msra.mxu0 0
    %467 = vmatpush.bf16.xpose.msra.mxu0 0
    %468 = vmatpush.bf16.xpose.msra.mxu0 0
    %469 = vmatpush.bf16.xpose.msra.mxu0 %v460
    %470 = vmatmul.bf16.gmra.mxu0 %v457
    %v471 = vpop.f32.mrf.mxu0
    %v472 = vadd.f32 %v246, %v471
    %v473 = vpop.f32.mrf.mxu0
    %474 = vdwg.mxu0
    %v476 = vunpack.c.l.b16 %v374
    %v477 = vpack.c.b16 %v476, %v476
    %478 = vrot.lane.b32.xlu0 %v477, 96
    %v479 = vpop.permute.xlu0 %478
    %v481 = vsel %vm383, %v374, 0
    %v484 = vsel %vm383, %v479, 0
    %486 = vmatpush.bf16.xpose.msra.mxu0 0
    %487 = vmatpush.bf16.xpose.msra.mxu0 0
    %488 = vmatpush.bf16.xpose.msra.mxu0 0
    %489 = vmatpush.bf16.xpose.msra.mxu0 0
    %490 = vmatpush.bf16.xpose.msra.mxu0 0
    %491 = vmatpush.bf16.xpose.msra.mxu0 0
    %492 = vmatpush.bf16.xpose.msra.mxu0 0
    %493 = vmatpush.bf16.xpose.msra.mxu0 %v484
    %494 = vmatmul.bf16.gmra.mxu0 %v481
    %v495 = vpop.f32.mrf.mxu0
    %v496 = vadd.f32 %v245, %v495
    %v497 = vpop.f32.mrf.mxu0
    %498 = vdwg.mxu0
    %v500 = vunpack.c.l.b16 %v375
    %v501 = vpack.c.b16 %v500, %v500
    %502 = vrot.lane.b32.xlu0 %v501, 96
    %v503 = vpop.permute.xlu0 %502
    %v505 = vsel %vm383, %v375, 0
    %v508 = vsel %vm383, %v503, 0
    %510 = vmatpush.bf16.xpose.msra.mxu0 0
    %511 = vmatpush.bf16.xpose.msra.mxu0 0
    %512 = vmatpush.bf16.xpose.msra.mxu0 0
    %513 = vmatpush.bf16.xpose.msra.mxu0 0
    %514 = vmatpush.bf16.xpose.msra.mxu0 0
    %515 = vmatpush.bf16.xpose.msra.mxu0 0
    %516 = vmatpush.bf16.xpose.msra.mxu0 0
    %517 = vmatpush.bf16.xpose.msra.mxu0 %v508
    %518 = vmatmul.bf16.gmra.mxu0 %v505
    %v519 = vpop.f32.mrf.mxu0
    %v520 = vadd.f32 %v246, %v519
    %v521 = vpop.f32.mrf.mxu0
    %522 = vdwg.mxu0
    %v524 = vunpack.c.l.b16 %v376
    %v525 = vpack.c.b16 %v524, %v524
    %526 = vrot.lane.b32.xlu0 %v525, 96
    %v527 = vpop.permute.xlu0 %526
    %v529 = vsel %vm383, %v376, 0
    %v532 = vsel %vm383, %v527, 0
    %534 = vmatpush.bf16.xpose.msra.mxu0 0
    %535 = vmatpush.bf16.xpose.msra.mxu0 0
    %536 = vmatpush.bf16.xpose.msra.mxu0 0
    %537 = vmatpush.bf16.xpose.msra.mxu0 0
    %538 = vmatpush.bf16.xpose.msra.mxu0 0
    %539 = vmatpush.bf16.xpose.msra.mxu0 0
    %540 = vmatpush.bf16.xpose.msra.mxu0 0
    %541 = vmatpush.bf16.xpose.msra.mxu0 %v532
    %542 = vmatmul.bf16.gmra.mxu0 %v529
    %v543 = vpop.f32.mrf.mxu0
    %v544 = vadd.f32 %v245, %v543
    %v545 = vpop.f32.mrf.mxu0
    %546 = vdwg.mxu0
    %v548 = vunpack.c.l.b16 %v377
    %v549 = vpack.c.b16 %v548, %v548
    %550 = vrot.lane.b32.xlu0 %v549, 96
    %v551 = vpop.permute.xlu0 %550
    %v553 = vsel %vm383, %v377, 0
    %v556 = vsel %vm383, %v551, 0
    %558 = vmatpush.bf16.xpose.msra.mxu0 0
    %559 = vmatpush.bf16.xpose.msra.mxu0 0
    %560 = vmatpush.bf16.xpose.msra.mxu0 0
    %561 = vmatpush.bf16.xpose.msra.mxu0 0
    %562 = vmatpush.bf16.xpose.msra.mxu0 0
    %563 = vmatpush.bf16.xpose.msra.mxu0 0
    %564 = vmatpush.bf16.xpose.msra.mxu0 0
    %565 = vmatpush.bf16.xpose.msra.mxu0 %v556
    %566 = vmatmul.bf16.gmra.mxu0 %v553
    %v567 = vpop.f32.mrf.mxu0
    %v568 = vadd.f32 %v246, %v567
    %v569 = vpop.f32.mrf.mxu0
    %570 = vdwg.mxu0
    %v571 = vsel %vm383, %v400, -inf
    %572 = vmax.xlane.f32.xlu0 %v571
    %v573 = vpop.xlane.xlu0 %572
    %v574 = vsel %vm383, %v424, -inf
    %575 = vmax.xlane.f32.xlu0 %v574
    %v576 = vpop.xlane.xlu0 %575
    %v577 = vsel %vm383, %v448, -inf
    %578 = vmax.xlane.f32.xlu0 %v577
    %v579 = vpop.xlane.xlu0 %578
    %v580 = vsel %vm383, %v472, -inf
    %581 = vmax.xlane.f32.xlu0 %v580
    %v582 = vpop.xlane.xlu0 %581
    %v583 = vsel %vm383, %v496, -inf
    %584 = vmax.xlane.f32.xlu0 %v583
    %v585 = vpop.xlane.xlu0 %584
    %v586 = vsel %vm383, %v520, -inf
    %587 = vmax.xlane.f32.xlu0 %v586
    %v588 = vpop.xlane.xlu0 %587
    %v589 = vsel %vm383, %v544, -inf
    %590 = vmax.xlane.f32.xlu0 %v589
    %v591 = vpop.xlane.xlu0 %590
    %v592 = vsel %vm383, %v568, -inf
    %593 = vmax.xlane.f32.xlu0 %v592
    %v594 = vpop.xlane.xlu0 %593
    %v595 = vsub.f32 %v400, %v573
    %v596 = vsub.f32 %v424, %v576
    %v597 = vsub.f32 %v448, %v579
    %v598 = vsub.f32 %v472, %v582
    %v599 = vsub.f32 %v496, %v585
    %v600 = vsub.f32 %v520, %v588
    %v601 = vsub.f32 %v544, %v591
    %v602 = vsub.f32 %v568, %v594
    %v603 = vmul.f32 %v595, 1.442695
    %v604 = vpow.pop %v603
    %v605 = vmul.f32 %v596, 1.442695
    %v606 = vpow.pop %v605
    %v607 = vmul.f32 %v597, 1.442695
    %v608 = vpow.pop %v607
    %v609 = vmul.f32 %v598, 1.442695
    %v610 = vpow.pop %v609
    %v611 = vmul.f32 %v599, 1.442695
    %v612 = vpow.pop %v611
    %v613 = vmul.f32 %v600, 1.442695
    %v614 = vpow.pop %v613
    %v615 = vmul.f32 %v601, 1.442695
    %v616 = vpow.pop %v615
    %v617 = vmul.f32 %v602, 1.442695
    %v618 = vpow.pop %v617
    %v619 = vsel %vm383, %v604, 0.0
    %620 = vadd.xlane.f32.xlu0 %v619
    %v621 = vpop.xlane.xlu0 %620
    %v622 = vsel %vm383, %v606, 0.0
    %623 = vadd.xlane.f32.xlu0 %v622
    %v624 = vpop.xlane.xlu0 %623
    %v625 = vsel %vm383, %v608, 0.0
    %626 = vadd.xlane.f32.xlu0 %v625
    %v627 = vpop.xlane.xlu0 %626
    %v628 = vsel %vm383, %v610, 0.0
    %629 = vadd.xlane.f32.xlu0 %v628
    %v630 = vpop.xlane.xlu0 %629
    %v631 = vsel %vm383, %v612, 0.0
    %632 = vadd.xlane.f32.xlu0 %v631
    %v633 = vpop.xlane.xlu0 %632
    %v634 = vsel %vm383, %v614, 0.0
    %635 = vadd.xlane.f32.xlu0 %v634
    %v636 = vpop.xlane.xlu0 %635
    %v637 = vsel %vm383, %v616, 0.0
    %638 = vadd.xlane.f32.xlu0 %v637
    %v639 = vpop.xlane.xlu0 %638
    %v640 = vsel %vm383, %v618, 0.0
    %641 = vadd.xlane.f32.xlu0 %v640
    %v642 = vpop.xlane.xlu0 %641
    %v643 = vrcp.pop %v621
    %v644 = vrcp.pop %v624
    %v645 = vrcp.pop %v627
    %v646 = vrcp.pop %v630
    %v647 = vrcp.pop %v633
    %v648 = vrcp.pop %v636
    %v649 = vrcp.pop %v639
    %v650 = vrcp.pop %v642
    %v651 = vmul.f32 %v604, %v643
    %v652 = vmul.f32 %v606, %v644
    %v653 = vmul.f32 %v608, %v645
    %v654 = vmul.f32 %v610, %v646
    %v655 = vmul.f32 %v612, %v647
    %v656 = vmul.f32 %v614, %v648
    %v657 = vmul.f32 %v616, %v649
    %v658 = vmul.f32 %v618, %v650
    %v659 = vpack.c.bf16 %v651, %v651
    %v660 = vpack.c.bf16 %v652, %v652
    %v661 = vpack.c.bf16 %v653, %v653
    %v662 = vpack.c.bf16 %v654, %v654
    %v663 = vpack.c.bf16 %v655, %v655
    %v664 = vpack.c.bf16 %v656, %v656
    %v665 = vpack.c.bf16 %v657, %v657
    %v666 = vpack.c.bf16 %v658, %v658
    %667 = vrot.lane.b32.xlu0 %v380, 64
    %v668 = vpop.permute.xlu0 %667
    %v670 = vsel %vm383, %v659, 0
    %vm672 = vcmask 1043456
    %v674 = vsel %vm672, %v668, 0
    %676 = vmatpush.bf16.msra.mxu0 0
    %677 = vmatpush.bf16.msra.mxu0 0
    %678 = vmatpush.bf16.msra.mxu0 0
    %679 = vmatpush.bf16.msra.mxu0 0
    %680 = vmatpush.bf16.msra.mxu0 0
    %681 = vmatpush.bf16.msra.mxu0 0
    %682 = vmatpush.bf16.msra.mxu0 0
    %683 = vmatpush.bf16.msra.mxu0 %v674
    %684 = vmatmul.bf16.gmra.mxu0 %v670
    %v685 = vpop.f32.mrf.mxu0
    %v686 = vadd.f32 0.0, %v685
    %v687 = vpop.f32.mrf.mxu0
    %688 = vdwg.mxu0
    %689 = vrot.lane.b32.xlu0 %v405, 64
    %v690 = vpop.permute.xlu0 %689
    %v692 = vsel %vm383, %v660, 0
    %v695 = vsel %vm672, %v690, 0
    %697 = vmatpush.bf16.msra.mxu0 0
    %698 = vmatpush.bf16.msra.mxu0 0
    %699 = vmatpush.bf16.msra.mxu0 0
    %700 = vmatpush.bf16.msra.mxu0 0
    %701 = vmatpush.bf16.msra.mxu0 0
    %702 = vmatpush.bf16.msra.mxu0 0
    %703 = vmatpush.bf16.msra.mxu0 0
    %704 = vmatpush.bf16.msra.mxu0 %v695
    %705 = vmatmul.bf16.gmra.mxu0 %v692
    %v706 = vpop.f32.mrf.mxu0
    %v707 = vadd.f32 0.0, %v706
    %v708 = vpop.f32.mrf.mxu0
    %709 = vdwg.mxu0
    %710 = vrot.lane.b32.xlu0 %v429, 64
    %v711 = vpop.permute.xlu0 %710
    %v713 = vsel %vm383, %v661, 0
    %v716 = vsel %vm672, %v711, 0
    %718 = vmatpush.bf16.msra.mxu0 0
    %719 = vmatpush.bf16.msra.mxu0 0
    %720 = vmatpush.bf16.msra.mxu0 0
    %721 = vmatpush.bf16.msra.mxu0 0
    %722 = vmatpush.bf16.msra.mxu0 0
    %723 = vmatpush.bf16.msra.mxu0 0
    %724 = vmatpush.bf16.msra.mxu0 0
    %725 = vmatpush.bf16.msra.mxu0 %v716
    %726 = vmatmul.bf16.gmra.mxu0 %v713
    %v727 = vpop.f32.mrf.mxu0
    %v728 = vadd.f32 0.0, %v727
    %v729 = vpop.f32.mrf.mxu0
    %730 = vdwg.mxu0
    %731 = vrot.lane.b32.xlu0 %v453, 64
    %v732 = vpop.permute.xlu0 %731
    %v734 = vsel %vm383, %v662, 0
    %v737 = vsel %vm672, %v732, 0
    %739 = vmatpush.bf16.msra.mxu0 0
    %740 = vmatpush.bf16.msra.mxu0 0
    %741 = vmatpush.bf16.msra.mxu0 0
    %742 = vmatpush.bf16.msra.mxu0 0
    %743 = vmatpush.bf16.msra.mxu0 0
    %744 = vmatpush.bf16.msra.mxu0 0
    %745 = vmatpush.bf16.msra.mxu0 0
    %746 = vmatpush.bf16.msra.mxu0 %v737
    %747 = vmatmul.bf16.gmra.mxu0 %v734
    %v748 = vpop.f32.mrf.mxu0
    %v749 = vadd.f32 0.0, %v748
    %v750 = vpop.f32.mrf.mxu0
    %751 = vdwg.mxu0
    %752 = vrot.lane.b32.xlu0 %v477, 64
    %v753 = vpop.permute.xlu0 %752
    %v755 = vsel %vm383, %v663, 0
    %v758 = vsel %vm672, %v753, 0
    %760 = vmatpush.bf16.msra.mxu0 0
    %761 = vmatpush.bf16.msra.mxu0 0
    %762 = vmatpush.bf16.msra.mxu0 0
    %763 = vmatpush.bf16.msra.mxu0 0
    %764 = vmatpush.bf16.msra.mxu0 0
    %765 = vmatpush.bf16.msra.mxu0 0
    %766 = vmatpush.bf16.msra.mxu0 0
    %767 = vmatpush.bf16.msra.mxu0 %v758
    %768 = vmatmul.bf16.gmra.mxu0 %v755
    %v769 = vpop.f32.mrf.mxu0
    %v770 = vadd.f32 0.0, %v769
    %v771 = vpop.f32.mrf.mxu0
    %772 = vdwg.mxu0
    %773 = vrot.lane.b32.xlu0 %v501, 64
    %v774 = vpop.permute.xlu0 %773
    %v776 = vsel %vm383, %v664, 0
    %v779 = vsel %vm672, %v774, 0
    %781 = vmatpush.bf16.msra.mxu0 0
    %782 = vmatpush.bf16.msra.mxu0 0
    %783 = vmatpush.bf16.msra.mxu0 0
    %784 = vmatpush.bf16.msra.mxu0 0
    %785 = vmatpush.bf16.msra.mxu0 0
    %786 = vmatpush.bf16.msra.mxu0 0
    %787 = vmatpush.bf16.msra.mxu0 0
    %788 = vmatpush.bf16.msra.mxu0 %v779
    %789 = vmatmul.bf16.gmra.mxu0 %v776
    %v790 = vpop.f32.mrf.mxu0
    %v791 = vadd.f32 0.0, %v790
    %v792 = vpop.f32.mrf.mxu0
    %793 = vdwg.mxu0
    %794 = vrot.lane.b32.xlu0 %v525, 64
    %v795 = vpop.permute.xlu0 %794
    %v797 = vsel %vm383, %v665, 0
    %v800 = vsel %vm672, %v795, 0
    %802 = vmatpush.bf16.msra.mxu0 0
    %803 = vmatpush.bf16.msra.mxu0 0
    %804 = vmatpush.bf16.msra.mxu0 0
    %805 = vmatpush.bf16.msra.mxu0 0
    %806 = vmatpush.bf16.msra.mxu0 0
    %807 = vmatpush.bf16.msra.mxu0 0
    %808 = vmatpush.bf16.msra.mxu0 0
    %809 = vmatpush.bf16.msra.mxu0 %v800
    %810 = vmatmul.bf16.gmra.mxu0 %v797
    %v811 = vpop.f32.mrf.mxu0
    %v812 = vadd.f32 0.0, %v811
    %v813 = vpop.f32.mrf.mxu0
    %814 = vdwg.mxu0
    %815 = vrot.lane.b32.xlu0 %v549, 64
    %v816 = vpop.permute.xlu0 %815
    %v818 = vsel %vm383, %v666, 0
    %v821 = vsel %vm672, %v816, 0
    %823 = vmatpush.bf16.msra.mxu0 0
    %824 = vmatpush.bf16.msra.mxu0 0
    %825 = vmatpush.bf16.msra.mxu0 0
    %826 = vmatpush.bf16.msra.mxu0 0
    %827 = vmatpush.bf16.msra.mxu0 0
    %828 = vmatpush.bf16.msra.mxu0 0
    %829 = vmatpush.bf16.msra.mxu0 0
    %830 = vmatpush.bf16.msra.mxu0 %v821
    %831 = vmatmul.bf16.gmra.mxu0 %v818
    %v832 = vpop.f32.mrf.mxu0
    %v833 = vadd.f32 0.0, %v832
    %v834 = vpop.f32.mrf.mxu0
    %835 = vdwg.mxu0
    %838 = vrot.lane.b32.xlu0 %v728, 8
    %v839 = vpop.permute.xlu0 %838
    %840 = vrot.lane.b32.xlu0 %v749, 8
    %v841 = vpop.permute.xlu0 %840
    %846 = vrot.lane.b32.xlu0 %v770, 16
    %v847 = vpop.permute.xlu0 %846
    %848 = vrot.lane.b32.xlu0 %v791, 16
    %v849 = vpop.permute.xlu0 %848
    %854 = vrot.lane.b32.xlu0 %v812, 24
    %v855 = vpop.permute.xlu0 %854
    %856 = vrot.lane.b32.xlu0 %v833, 24
    %v857 = vpop.permute.xlu0 %856
    %v860 = vsel %vm383, %v686, %v839
    %v861 = vsel %vm383, %v707, %v841
    %vm862 = vcmask 130048
    %v863 = vsel %vm862, %v860, %v847
    %v864 = vsel %vm862, %v861, %v849
    %vm865 = vcmask 195584
    %v866 = vsel %vm865, %v863, %v855
    %v867 = vsel %vm865, %v864, %v857
    %v868 = vpack.c.bf16 %v867, %v866
    %v870 = vperm.slane %v205, 0
    %v876 = vunpack.c.l.b16 %v201
    %v877 = vunpack.c.l.b16 %v202
    %v878 = vunpack.c.l.b16 %v203
    %v879 = vunpack.c.l.b16 %v204
    %v880 = vpack.c.b16 %v877, %v876
    %v881 = vpack.c.b16 %v879, %v878
    %v885 = vsel %vm249, %v868, 0
    %887 = vmatpush.bf16.msra.mxu0 0
    %888 = vmatpush.bf16.msra.mxu0 0
    %889 = vmatpush.bf16.msra.mxu0 0
    %890 = vmatpush.bf16.msra.mxu0 0
    %891 = vmatpush.bf16.msra.mxu0 0
    %892 = vmatpush.bf16.msra.mxu0 0
    %893 = vmatpush.bf16.msra.mxu0 %v881
    %894 = vmatpush.bf16.msra.mxu0 %v880
    %895 = vmatmul.bf16.gmra.mxu0 %v885
    %v896 = vpop.f32.mrf.mxu0
    %v897 = vadd.f32 %v870, %v896
    %v898 = vpop.f32.mrf.mxu0
    %v899 = vadd.f32 %v870, %v898
    %900 = vdwg.mxu0
    %v901 = vadd.f32 %v239, %v897
    %v902 = vadd.f32 %v240, %v899
    %v903 = vsel %vm249, %v901, 0.0
    %904 = vadd.xlane.f32.xlu0 %v903
    %v905 = vpop.xlane.xlu0 %904
    %v906 = vsel %vm249, %v902, 0.0
    %907 = vadd.xlane.f32.xlu0 %v906
    %v908 = vpop.xlane.xlu0 %907
    %v909 = vmul.f32 %v905, %v262
    %v910 = vmul.f32 %v908, %v262
    %v911 = vsub.f32 %v901, %v909
    %v912 = vsub.f32 %v902, %v910
    %v913 = vmul.f32 %v911, %v911
    %v914 = vmul.f32 %v912, %v912
    %v915 = vsel %vm249, %v913, 0.0
    %916 = vadd.xlane.f32.xlu0 %v915
    %v917 = vpop.xlane.xlu0 %916
    %v918 = vsel %vm249, %v914, 0.0
    %919 = vadd.xlane.f32.xlu0 %v918
    %v920 = vpop.xlane.xlu0 %919
    %v921 = vmul.f32 %v917, 0.032258064
    %v922 = vmul.f32 %v920, 0.032258064
    %v923 = vrsqrt.pop %v921
    %v924 = vmul.f32 %v923, %v921
    %v925 = vmul.f32 %v924, %v923
    %v926 = vmul.f32 0.5, %v925
    %v927 = vsub.f32 1.5, %v926
    %v928 = vmul.f32 %v923, %v927
    %v929 = vmul.f32 %v921, %v928
    %vm930 = vcmp.eq.f32.partialorder %v921, inf
    %v931 = vsel %vm930, %v921, %v929
    %vm932 = vcmp.eq.f32.partialorder %v921, 0.0
    %v933 = vand.u32 %v921, 2147483648
    %v934 = vsel %vm932, %v933, %v931
    %v935 = vrsqrt.pop %v922
    %v936 = vmul.f32 %v935, %v922
    %v937 = vmul.f32 %v936, %v935
    %v938 = vmul.f32 0.5, %v937
    %v939 = vsub.f32 1.5, %v938
    %v940 = vmul.f32 %v935, %v939
    %v941 = vmul.f32 %v922, %v940
    %vm942 = vcmp.eq.f32.partialorder %v922, inf
    %v943 = vsel %vm942, %v922, %v941
    %vm944 = vcmp.eq.f32.partialorder %v922, 0.0
    %v945 = vand.u32 %v922, 2147483648
    %v946 = vsel %vm944, %v945, %v943
    %v947 = vadd.f32 %v934, 1e-06
    %v948 = vadd.f32 %v946, 1e-06
    %v949 = vrcp.pop %v947
    %v950 = vrcp.pop %v948
    %v951 = vmul.f32 %v911, %v949
    %v952 = vmul.f32 %v912, %v950
    %v954 = vperm.slane %v206, 0
    %v956 = vmul.f32 %v954, %v951
    %v957 = vmul.f32 %v954, %v952
    %v959 = vperm.slane %v207, 0
    %v961 = vadd.f32 %v956, %v959
    %v962 = vadd.f32 %v957, %v959
    %v963 = vpack.c.bf16 %v962, %v961
    %v965 = vperm.slane %v212, 0
    %v971 = vunpack.c.l.b16 %v208
    %v972 = vunpack.c.l.b16 %v209
    %v973 = vunpack.c.l.b16 %v210
    %v974 = vunpack.c.l.b16 %v211
    %v975 = vpack.c.b16 %v972, %v971
    %v976 = vpack.c.b16 %v974, %v973
    %v980 = vsel %vm249, %v963, 0
    %982 = vmatpush.bf16.msra.mxu0 0
    %983 = vmatpush.bf16.msra.mxu0 0
    %984 = vmatpush.bf16.msra.mxu0 0
    %985 = vmatpush.bf16.msra.mxu0 0
    %986 = vmatpush.bf16.msra.mxu0 0
    %987 = vmatpush.bf16.msra.mxu0 0
    %988 = vmatpush.bf16.msra.mxu0 %v976
    %989 = vmatpush.bf16.msra.mxu0 %v975
    %990 = vmatmul.bf16.gmra.mxu0 %v980
    %v991 = vpop.f32.mrf.mxu0
    %v992 = vadd.f32 %v965, %v991
    %v993 = vpop.f32.mrf.mxu0
    %v994 = vadd.f32 %v965, %v993
    %995 = vdwg.mxu0
    %998 = vrot.lane.b32.xlu0 %v992, 120
    %v999 = vpop.permute.xlu0 %998
    %1000 = vrot.lane.b32.xlu0 %v994, 120
    %v1001 = vpop.permute.xlu0 %1000
    %1004 = vrot.lane.b32.xlu0 %v992, 112
    %v1005 = vpop.permute.xlu0 %1004
    %1006 = vrot.lane.b32.xlu0 %v994, 112
    %v1007 = vpop.permute.xlu0 %1006
    %1010 = vrot.lane.b32.xlu0 %v992, 104
    %v1011 = vpop.permute.xlu0 %1010
    %1012 = vrot.lane.b32.xlu0 %v994, 104
    %v1013 = vpop.permute.xlu0 %1012
    %v1016 = vpack.c.bf16 %v992, %v992
    %v1017 = vpack.c.bf16 %v994, %v994
    %v1018 = vpack.c.bf16 %v999, %v999
    %v1019 = vpack.c.bf16 %v1001, %v1001
    %v1020 = vpack.c.bf16 %v1005, %v1005
    %v1021 = vpack.c.bf16 %v1007, %v1007
    %v1022 = vpack.c.bf16 %v1011, %v1011
    %v1023 = vpack.c.bf16 %v1013, %v1013
    %v1028 = vrot.slane %v241, 4
    %v1029 = vrot.slane %v243, 4
    %1030 = vst [vmem:[#allocation1] ss:$2 sm:$0xff] %v241
    %s1031 = scalar_lea.vmem [#allocation1], 1
    %1032 = vst [vmem:[%s1031] ss:$2 sm:$0xff] %v1028
    %s1033 = scalar_lea.vmem [#allocation1], 16
    %1034 = vst [vmem:[%s1033] ss:$2 sm:$0xff] %v242
    %s1035 = scalar_lea.vmem [#allocation1], 17
    %1036 = vst [vmem:[%s1035] ss:$2 sm:$0xff] %v243
    %s1037 = scalar_lea.vmem [#allocation1], 32
    %1038 = vst [vmem:[%s1037] ss:$2 sm:$0xff] %v1029
    %s1039 = scalar_lea.vmem [#allocation1], 33
    %1040 = vst [vmem:[%s1039] ss:$2 sm:$0xff] %v244
    %v1041 = vld.sshfl [vmem:[#allocation1] sm:$0xff pattern:$0x75316420]
    %v1042 = vld.sshfl [vmem:[#allocation1 + $0x10] sm:$0xff pattern:$0x75316420]
    %v1043 = vld.sshfl [vmem:[#allocation1 + $0x20] sm:$0xff pattern:$0x75316420]
    %v1047 = vpack.c.bf16 %v1042, %v1041
    %v1048 = vpack.c.bf16 %v1043, %v1043
    %v1050 = vperm.slane %v217, 0
    %v1056 = vunpack.c.l.b16 %v213
    %v1057 = vunpack.c.l.b16 %v214
    %v1058 = vunpack.c.l.b16 %v215
    %v1059 = vunpack.c.l.b16 %v216
    %v1060 = vpack.c.b16 %v1057, %v1056
    %v1061 = vpack.c.b16 %v1059, %v1058
    %v1065 = vsel %vm249, %v1047, 0
    %v1068 = vsel %vm249, %v1048, 0
    %1070 = vmatpush.bf16.msra.mxu0 0
    %1071 = vmatpush.bf16.msra.mxu0 0
    %1072 = vmatpush.bf16.msra.mxu0 0
    %1073 = vmatpush.bf16.msra.mxu0 0
    %1074 = vmatpush.bf16.msra.mxu0 0
    %1075 = vmatpush.bf16.msra.mxu0 0
    %1076 = vmatpush.bf16.msra.mxu0 %v1061
    %1077 = vmatpush.bf16.msra.mxu0 %v1060
    %1078 = vmatmul.bf16.gmra.mxu0 %v1065
    %v1079 = vpop.f32.mrf.mxu0
    %v1080 = vadd.f32 %v1050, %v1079
    %v1081 = vpop.f32.mrf.mxu0
    %v1082 = vadd.f32 %v1050, %v1081
    %1083 = vmatmul.bf16.gmra.mxu0 %v1068
    %v1084 = vpop.f32.mrf.mxu0
    %v1085 = vadd.f32 %v1050, %v1084
    %v1086 = vpop.f32.mrf.mxu0
    %1087 = vdwg.mxu0
    %v1091 = vrot.slane %v1080, 4
    %v1092 = vrot.slane %v1082, 4
    %v1093 = vrot.slane %v1085, 4
    %1094 = vrot.lane.b32.xlu0 %v1080, 120
    %v1095 = vpop.permute.xlu0 %1094
    %1096 = vrot.lane.b32.xlu0 %v1091, 120
    %v1097 = vpop.permute.xlu0 %1096
    %1098 = vrot.lane.b32.xlu0 %v1082, 120
    %v1099 = vpop.permute.xlu0 %1098
    %1100 = vrot.lane.b32.xlu0 %v1092, 120
    %v1101 = vpop.permute.xlu0 %1100
    %1102 = vrot.lane.b32.xlu0 %v1085, 120
    %v1103 = vpop.permute.xlu0 %1102
    %1104 = vrot.lane.b32.xlu0 %v1093, 120
    %v1105 = vpop.permute.xlu0 %1104
    %1106 = vrot.lane.b32.xlu0 %v1080, 112
    %v1107 = vpop.permute.xlu0 %1106
    %1108 = vrot.lane.b32.xlu0 %v1091, 112
    %v1109 = vpop.permute.xlu0 %1108
    %1110 = vrot.lane.b32.xlu0 %v1082, 112
    %v1111 = vpop.permute.xlu0 %1110
    %1112 = vrot.lane.b32.xlu0 %v1092, 112
    %v1113 = vpop.permute.xlu0 %1112
    %1114 = vrot.lane.b32.xlu0 %v1085, 112
    %v1115 = vpop.permute.xlu0 %1114
    %1116 = vrot.lane.b32.xlu0 %v1093, 112
    %v1117 = vpop.permute.xlu0 %1116
    %1118 = vrot.lane.b32.xlu0 %v1080, 104
    %v1119 = vpop.permute.xlu0 %1118
    %1120 = vrot.lane.b32.xlu0 %v1091, 104
    %v1121 = vpop.permute.xlu0 %1120
    %1122 = vrot.lane.b32.xlu0 %v1082, 104
    %v1123 = vpop.permute.xlu0 %1122
    %1124 = vrot.lane.b32.xlu0 %v1092, 104
    %v1125 = vpop.permute.xlu0 %1124
    %1126 = vrot.lane.b32.xlu0 %v1085, 104
    %v1127 = vpop.permute.xlu0 %1126
    %1128 = vrot.lane.b32.xlu0 %v1093, 104
    %v1129 = vpop.permute.xlu0 %1128
    %1130 = vst [vmem:[#allocation1] ss:$2 sm:$0xff] %v1080
    %s1131 = scalar_lea.vmem [#allocation1], 1
    %1132 = vst [vmem:[%s1131] ss:$2 sm:$0xff] %v1091
    %s1133 = scalar_lea.vmem [#allocation1], 16
    %1134 = vst [vmem:[%s1133] ss:$2 sm:$0xff] %v1082
    %v1135 = vld.sshfl [vmem:[#allocation1] sm:$0xff pattern:$0x75316420]
    %v1136 = vld.sshfl [vmem:[#allocation1 + $0x10] sm:$0xff pattern:$0x75316420]
    %s1137 = scalar_lea.vmem [#allocation1], 32
    %1138 = vst [vmem:[%s1137] ss:$2 sm:$0xff] %v1092
    %s1139 = scalar_lea.vmem [#allocation1], 33
    %1140 = vst [vmem:[%s1139] ss:$2 sm:$0xff] %v1085
    %s1141 = scalar_lea.vmem [#allocation1], 48
    %1142 = vst [vmem:[%s1141] ss:$2 sm:$0xff] %v1093
    %v1143 = vld.sshfl [vmem:[#allocation1 + $0x20] sm:$0xff pattern:$0x75316420]
    %v1144 = vld.sshfl [vmem:[#allocation1 + $0x30] sm:$0xff pattern:$0x75316420]
    %1145 = vst [vmem:[#allocation1] ss:$2 sm:$0xff] %v1095
    %1146 = vst [vmem:[%s1131] ss:$2 sm:$0xff] %v1097
    %1147 = vst [vmem:[%s1133] ss:$2 sm:$0xff] %v1099
    %v1148 = vld.sshfl [vmem:[#allocation1] sm:$0xff pattern:$0x75316420]
    %v1149 = vld.sshfl [vmem:[#allocation1 + $0x10] sm:$0xff pattern:$0x75316420]
    %1150 = vst [vmem:[%s1137] ss:$2 sm:$0xff] %v1101
    %1151 = vst [vmem:[%s1139] ss:$2 sm:$0xff] %v1103
    %1152 = vst [vmem:[%s1141] ss:$2 sm:$0xff] %v1105
    %v1153 = vld.sshfl [vmem:[#allocation1 + $0x20] sm:$0xff pattern:$0x75316420]
    %v1154 = vld.sshfl [vmem:[#allocation1 + $0x30] sm:$0xff pattern:$0x75316420]
    %1155 = vst [vmem:[#allocation1] ss:$2 sm:$0xff] %v1107
    %1156 = vst [vmem:[%s1131] ss:$2 sm:$0xff] %v1109
    %1157 = vst [vmem:[%s1133] ss:$2 sm:$0xff] %v1111
    %v1158 = vld.sshfl [vmem:[#allocation1] sm:$0xff pattern:$0x75316420]
    %v1159 = vld.sshfl [vmem:[#allocation1 + $0x10] sm:$0xff pattern:$0x75316420]
    %1160 = vst [vmem:[%s1137] ss:$2 sm:$0xff] %v1113
    %1161 = vst [vmem:[%s1139] ss:$2 sm:$0xff] %v1115
    %1162 = vst [vmem:[%s1141] ss:$2 sm:$0xff] %v1117
    %v1163 = vld.sshfl [vmem:[#allocation1 + $0x20] sm:$0xff pattern:$0x75316420]
    %v1164 = vld.sshfl [vmem:[#allocation1 + $0x30] sm:$0xff pattern:$0x75316420]
    %1165 = vst [vmem:[#allocation1] ss:$2 sm:$0xff] %v1119
    %1166 = vst [vmem:[%s1131] ss:$2 sm:$0xff] %v1121
    %1167 = vst [vmem:[%s1133] ss:$2 sm:$0xff] %v1123
    %v1168 = vld.sshfl [vmem:[#allocation1] sm:$0xff pattern:$0x75316420]
    %v1169 = vld.sshfl [vmem:[#allocation1 + $0x10] sm:$0xff pattern:$0x75316420]
    %1170 = vst [vmem:[%s1137] ss:$2 sm:$0xff] %v1125
    %1171 = vst [vmem:[%s1139] ss:$2 sm:$0xff] %v1127
    %1172 = vst [vmem:[%s1141] ss:$2 sm:$0xff] %v1129
    %v1173 = vld.sshfl [vmem:[#allocation1 + $0x20] sm:$0xff pattern:$0x75316420]
    %v1174 = vld.sshfl [vmem:[#allocation1 + $0x30] sm:$0xff pattern:$0x75316420]
    %v1191 = vpack.c.bf16 %v1135, %v1135
    %v1192 = vpack.c.bf16 %v1136, %v1136
    %v1193 = vpack.c.bf16 %v1143, %v1143
    %v1194 = vpack.c.bf16 %v1144, %v1144
    %v1195 = vpack.c.bf16 %v1148, %v1148
    %v1196 = vpack.c.bf16 %v1149, %v1149
    %v1197 = vpack.c.bf16 %v1153, %v1153
    %v1198 = vpack.c.bf16 %v1154, %v1154
    %v1199 = vpack.c.bf16 %v1158, %v1158
    %v1200 = vpack.c.bf16 %v1159, %v1159
    %v1201 = vpack.c.bf16 %v1163, %v1163
    %v1202 = vpack.c.bf16 %v1164, %v1164
    %v1203 = vpack.c.bf16 %v1168, %v1168
    %v1204 = vpack.c.bf16 %v1169, %v1169
    %v1205 = vpack.c.bf16 %v1173, %v1173
    %v1206 = vpack.c.bf16 %v1174, %v1174
    %1207 = vst [vmem:[#allocation1] ss:$2 sm:$0xff] %v1080
    %s1208 = scalar_lea.vmem [#allocation1], 1
    %1209 = vst [vmem:[%s1208] ss:$2 sm:$0xff] %v1091
    %s1210 = scalar_lea.vmem [#allocation1], 16
    %1211 = vst [vmem:[%s1210] ss:$2 sm:$0xff] %v1082
    %v1212 = vld.sshfl [vmem:[#allocation1] sm:$0xff pattern:$0x75316420]
    %v1213 = vld.sshfl [vmem:[#allocation1 + $0x10] sm:$0xff pattern:$0x75316420]
    %s1214 = scalar_lea.vmem [#allocation1], 32
    %1215 = vst [vmem:[%s1214] ss:$2 sm:$0xff] %v1092
    %s1216 = scalar_lea.vmem [#allocation1], 33
    %1217 = vst [vmem:[%s1216] ss:$2 sm:$0xff] %v1085
    %s1218 = scalar_lea.vmem [#allocation1], 48
    %1219 = vst [vmem:[%s1218] ss:$2 sm:$0xff] %v1093
    %v1220 = vld.sshfl [vmem:[#allocation1 + $0x20] sm:$0xff pattern:$0x75316420]
    %v1221 = vld.sshfl [vmem:[#allocation1 + $0x30] sm:$0xff pattern:$0x75316420]
    %1222 = vst [vmem:[#allocation1] ss:$2 sm:$0xff] %v1095
    %1223 = vst [vmem:[%s1208] ss:$2 sm:$0xff] %v1097
    %1224 = vst [vmem:[%s1210] ss:$2 sm:$0xff] %v1099
    %v1225 = vld.sshfl [vmem:[#allocation1] sm:$0xff pattern:$0x75316420]
    %v1226 = vld.sshfl [vmem:[#allocation1 + $0x10] sm:$0xff pattern:$0x75316420]
    %1227 = vst [vmem:[%s1214] ss:$2 sm:$0xff] %v1101
    %1228 = vst [vmem:[%s1216] ss:$2 sm:$0xff] %v1103
    %1229 = vst [vmem:[%s1218] ss:$2 sm:$0xff] %v1105
    %v1230 = vld.sshfl [vmem:[#allocation1 + $0x20] sm:$0xff pattern:$0x75316420]
    %v1231 = vld.sshfl [vmem:[#allocation1 + $0x30] sm:$0xff pattern:$0x75316420]
    %1232 = vst [vmem:[#allocation1] ss:$2 sm:$0xff] %v1107
    %1233 = vst [vmem:[%s1208] ss:$2 sm:$0xff] %v1109
    %1234 = vst [vmem:[%s1210] ss:$2 sm:$0xff] %v1111
    %v1235 = vld.sshfl [vmem:[#allocation1] sm:$0xff pattern:$0x75316420]
    %v1236 = vld.sshfl [vmem:[#allocation1 + $0x10] sm:$0xff pattern:$0x75316420]
    %1237 = vst [vmem:[%s1214] ss:$2 sm:$0xff] %v1113
    %1238 = vst [vmem:[%s1216] ss:$2 sm:$0xff] %v1115
    %1239 = vst [vmem:[%s1218] ss:$2 sm:$0xff] %v1117
    %v1240 = vld.sshfl [vmem:[#allocation1 + $0x20] sm:$0xff pattern:$0x75316420]
    %v1241 = vld.sshfl [vmem:[#allocation1 + $0x30] sm:$0xff pattern:$0x75316420]
    %1242 = vst [vmem:[#allocation1] ss:$2 sm:$0xff] %v1119
    %1243 = vst [vmem:[%s1208] ss:$2 sm:$0xff] %v1121
    %1244 = vst [vmem:[%s1210] ss:$2 sm:$0xff] %v1123
    %v1245 = vld.sshfl [vmem:[#allocation1] sm:$0xff pattern:$0x75316420]
    %v1246 = vld.sshfl [vmem:[#allocation1 + $0x10] sm:$0xff pattern:$0x75316420]
    %1247 = vst [vmem:[%s1214] ss:$2 sm:$0xff] %v1125
    %1248 = vst [vmem:[%s1216] ss:$2 sm:$0xff] %v1127
    %1249 = vst [vmem:[%s1218] ss:$2 sm:$0xff] %v1129
    %v1250 = vld.sshfl [vmem:[#allocation1 + $0x20] sm:$0xff pattern:$0x75316420]
    %v1251 = vld.sshfl [vmem:[#allocation1 + $0x30] sm:$0xff pattern:$0x75316420]
    %v1268 = vpack.c.bf16 %v1212, %v1212
    %v1269 = vpack.c.bf16 %v1213, %v1213
    %v1270 = vpack.c.bf16 %v1220, %v1220
    %v1271 = vpack.c.bf16 %v1221, %v1221
    %v1272 = vpack.c.bf16 %v1225, %v1225
    %v1273 = vpack.c.bf16 %v1226, %v1226
    %v1274 = vpack.c.bf16 %v1230, %v1230
    %v1275 = vpack.c.bf16 %v1231, %v1231
    %v1276 = vpack.c.bf16 %v1235, %v1235
    %v1277 = vpack.c.bf16 %v1236, %v1236
    %v1278 = vpack.c.bf16 %v1240, %v1240
    %v1279 = vpack.c.bf16 %v1241, %v1241
    %v1280 = vpack.c.bf16 %v1245, %v1245
    %v1281 = vpack.c.bf16 %v1246, %v1246
    %v1282 = vpack.c.bf16 %v1250, %v1250
    %v1283 = vpack.c.bf16 %v1251, %v1251
    %v1286 = vperm.slane %v247, 0
    %v1287 = vperm.slane %v248, 0
    %v1292 = vunpack.c.l.b16 %v1191
    %v1293 = vunpack.c.l.b16 %v1192
    %v1294 = vpack.c.b16 %v1293, %v1292
    %v1296 = vsel %vm383, %v1016, 0
    %v1299 = vsel %vm383, %v1294, 0
    %1301 = vmatpush.bf16.xpose.msra.mxu0 0
    %1302 = vmatpush.bf16.xpose.msra.mxu0 0
    %1303 = vmatpush.bf16.xpose.msra.mxu0 0
    %1304 = vmatpush.bf16.xpose.msra.mxu0 0
    %1305 = vmatpush.bf16.xpose.msra.mxu0 0
    %1306 = vmatpush.bf16.xpose.msra.mxu0 0
    %1307 = vmatpush.bf16.xpose.msra.mxu0 0
    %1308 = vmatpush.bf16.xpose.msra.mxu0 %v1299
    %1309 = vmatmul.bf16.gmra.mxu0 %v1296
    %v1310 = vpop.f32.mrf.mxu0
    %v1311 = vadd.f32 %v1286, %v1310
    %v1312 = vpop.f32.mrf.mxu0
    %1313 = vdwg.mxu0
    %v1316 = vunpack.c.l.b16 %v1193
    %v1317 = vunpack.c.l.b16 %v1194
    %v1318 = vpack.c.b16 %v1317, %v1316
    %v1320 = vsel %vm383, %v1017, 0
    %v1323 = vsel %vm383, %v1318, 0
    %1325 = vmatpush.bf16.xpose.msra.mxu0 0
    %1326 = vmatpush.bf16.xpose.msra.mxu0 0
    %1327 = vmatpush.bf16.xpose.msra.mxu0 0
    %1328 = vmatpush.bf16.xpose.msra.mxu0 0
    %1329 = vmatpush.bf16.xpose.msra.mxu0 0
    %1330 = vmatpush.bf16.xpose.msra.mxu0 0
    %1331 = vmatpush.bf16.xpose.msra.mxu0 0
    %1332 = vmatpush.bf16.xpose.msra.mxu0 %v1323
    %1333 = vmatmul.bf16.gmra.mxu0 %v1320
    %v1334 = vpop.f32.mrf.mxu0
    %v1335 = vadd.f32 %v1287, %v1334
    %v1336 = vpop.f32.mrf.mxu0
    %1337 = vdwg.mxu0
    %v1340 = vunpack.c.l.b16 %v1195
    %v1341 = vunpack.c.l.b16 %v1196
    %v1342 = vpack.c.b16 %v1341, %v1340
    %v1344 = vsel %vm383, %v1018, 0
    %v1347 = vsel %vm383, %v1342, 0
    %1349 = vmatpush.bf16.xpose.msra.mxu0 0
    %1350 = vmatpush.bf16.xpose.msra.mxu0 0
    %1351 = vmatpush.bf16.xpose.msra.mxu0 0
    %1352 = vmatpush.bf16.xpose.msra.mxu0 0
    %1353 = vmatpush.bf16.xpose.msra.mxu0 0
    %1354 = vmatpush.bf16.xpose.msra.mxu0 0
    %1355 = vmatpush.bf16.xpose.msra.mxu0 0
    %1356 = vmatpush.bf16.xpose.msra.mxu0 %v1347
    %1357 = vmatmul.bf16.gmra.mxu0 %v1344
    %v1358 = vpop.f32.mrf.mxu0
    %v1359 = vadd.f32 %v1286, %v1358
    %v1360 = vpop.f32.mrf.mxu0
    %1361 = vdwg.mxu0
    %v1364 = vunpack.c.l.b16 %v1197
    %v1365 = vunpack.c.l.b16 %v1198
    %v1366 = vpack.c.b16 %v1365, %v1364
    %v1368 = vsel %vm383, %v1019, 0
    %v1371 = vsel %vm383, %v1366, 0
    %1373 = vmatpush.bf16.xpose.msra.mxu0 0
    %1374 = vmatpush.bf16.xpose.msra.mxu0 0
    %1375 = vmatpush.bf16.xpose.msra.mxu0 0
    %1376 = vmatpush.bf16.xpose.msra.mxu0 0
    %1377 = vmatpush.bf16.xpose.msra.mxu0 0
    %1378 = vmatpush.bf16.xpose.msra.mxu0 0
    %1379 = vmatpush.bf16.xpose.msra.mxu0 0
    %1380 = vmatpush.bf16.xpose.msra.mxu0 %v1371
    %1381 = vmatmul.bf16.gmra.mxu0 %v1368
    %v1382 = vpop.f32.mrf.mxu0
    %v1383 = vadd.f32 %v1287, %v1382
    %v1384 = vpop.f32.mrf.mxu0
    %1385 = vdwg.mxu0
    %v1388 = vunpack.c.l.b16 %v1199
    %v1389 = vunpack.c.l.b16 %v1200
    %v1390 = vpack.c.b16 %v1389, %v1388
    %v1392 = vsel %vm383, %v1020, 0
    %v1395 = vsel %vm383, %v1390, 0
    %1397 = vmatpush.bf16.xpose.msra.mxu0 0
    %1398 = vmatpush.bf16.xpose.msra.mxu0 0
    %1399 = vmatpush.bf16.xpose.msra.mxu0 0
    %1400 = vmatpush.bf16.xpose.msra.mxu0 0
    %1401 = vmatpush.bf16.xpose.msra.mxu0 0
    %1402 = vmatpush.bf16.xpose.msra.mxu0 0
    %1403 = vmatpush.bf16.xpose.msra.mxu0 0
    %1404 = vmatpush.bf16.xpose.msra.mxu0 %v1395
    %1405 = vmatmul.bf16.gmra.mxu0 %v1392
    %v1406 = vpop.f32.mrf.mxu0
    %v1407 = vadd.f32 %v1286, %v1406
    %v1408 = vpop.f32.mrf.mxu0
    %1409 = vdwg.mxu0
    %v1412 = vunpack.c.l.b16 %v1201
    %v1413 = vunpack.c.l.b16 %v1202
    %v1414 = vpack.c.b16 %v1413, %v1412
    %v1416 = vsel %vm383, %v1021, 0
    %v1419 = vsel %vm383, %v1414, 0
    %1421 = vmatpush.bf16.xpose.msra.mxu0 0
    %1422 = vmatpush.bf16.xpose.msra.mxu0 0
    %1423 = vmatpush.bf16.xpose.msra.mxu0 0
    %1424 = vmatpush.bf16.xpose.msra.mxu0 0
    %1425 = vmatpush.bf16.xpose.msra.mxu0 0
    %1426 = vmatpush.bf16.xpose.msra.mxu0 0
    %1427 = vmatpush.bf16.xpose.msra.mxu0 0
    %1428 = vmatpush.bf16.xpose.msra.mxu0 %v1419
    %1429 = vmatmul.bf16.gmra.mxu0 %v1416
    %v1430 = vpop.f32.mrf.mxu0
    %v1431 = vadd.f32 %v1287, %v1430
    %v1432 = vpop.f32.mrf.mxu0
    %1433 = vdwg.mxu0
    %v1436 = vunpack.c.l.b16 %v1203
    %v1437 = vunpack.c.l.b16 %v1204
    %v1438 = vpack.c.b16 %v1437, %v1436
    %v1440 = vsel %vm383, %v1022, 0
    %v1443 = vsel %vm383, %v1438, 0
    %1445 = vmatpush.bf16.xpose.msra.mxu0 0
    %1446 = vmatpush.bf16.xpose.msra.mxu0 0
    %1447 = vmatpush.bf16.xpose.msra.mxu0 0
    %1448 = vmatpush.bf16.xpose.msra.mxu0 0
    %1449 = vmatpush.bf16.xpose.msra.mxu0 0
    %1450 = vmatpush.bf16.xpose.msra.mxu0 0
    %1451 = vmatpush.bf16.xpose.msra.mxu0 0
    %1452 = vmatpush.bf16.xpose.msra.mxu0 %v1443
    %1453 = vmatmul.bf16.gmra.mxu0 %v1440
    %v1454 = vpop.f32.mrf.mxu0
    %v1455 = vadd.f32 %v1286, %v1454
    %v1456 = vpop.f32.mrf.mxu0
    %1457 = vdwg.mxu0
    %v1460 = vunpack.c.l.b16 %v1205
    %v1461 = vunpack.c.l.b16 %v1206
    %v1462 = vpack.c.b16 %v1461, %v1460
    %v1464 = vsel %vm383, %v1023, 0
    %v1467 = vsel %vm383, %v1462, 0
    %1469 = vmatpush.bf16.xpose.msra.mxu0 0
    %1470 = vmatpush.bf16.xpose.msra.mxu0 0
    %1471 = vmatpush.bf16.xpose.msra.mxu0 0
    %1472 = vmatpush.bf16.xpose.msra.mxu0 0
    %1473 = vmatpush.bf16.xpose.msra.mxu0 0
    %1474 = vmatpush.bf16.xpose.msra.mxu0 0
    %1475 = vmatpush.bf16.xpose.msra.mxu0 0
    %1476 = vmatpush.bf16.xpose.msra.mxu0 %v1467
    %1477 = vmatmul.bf16.gmra.mxu0 %v1464
    %v1478 = vpop.f32.mrf.mxu0
    %v1479 = vadd.f32 %v1287, %v1478
    %v1480 = vpop.f32.mrf.mxu0
    %1481 = vdwg.mxu0
    %vm1482 = vcmask 97280
    %v1483 = vsel %vm1482, %v1311, -inf
    %1484 = vmax.xlane.f32.xlu0 %v1483
    %v1485 = vpop.xlane.xlu0 %1484
    %v1486 = vsel %vm1482, %v1335, -inf
    %1487 = vmax.xlane.f32.xlu0 %v1486
    %v1488 = vpop.xlane.xlu0 %1487
    %v1489 = vsel %vm1482, %v1359, -inf
    %1490 = vmax.xlane.f32.xlu0 %v1489
    %v1491 = vpop.xlane.xlu0 %1490
    %v1492 = vsel %vm1482, %v1383, -inf
    %1493 = vmax.xlane.f32.xlu0 %v1492
    %v1494 = vpop.xlane.xlu0 %1493
    %v1495 = vsel %vm1482, %v1407, -inf
    %1496 = vmax.xlane.f32.xlu0 %v1495
    %v1497 = vpop.xlane.xlu0 %1496
    %v1498 = vsel %vm1482, %v1431, -inf
    %1499 = vmax.xlane.f32.xlu0 %v1498
    %v1500 = vpop.xlane.xlu0 %1499
    %v1501 = vsel %vm1482, %v1455, -inf
    %1502 = vmax.xlane.f32.xlu0 %v1501
    %v1503 = vpop.xlane.xlu0 %1502
    %v1504 = vsel %vm1482, %v1479, -inf
    %1505 = vmax.xlane.f32.xlu0 %v1504
    %v1506 = vpop.xlane.xlu0 %1505
    %v1507 = vsub.f32 %v1311, %v1485
    %v1508 = vsub.f32 %v1335, %v1488
    %v1509 = vsub.f32 %v1359, %v1491
    %v1510 = vsub.f32 %v1383, %v1494
    %v1511 = vsub.f32 %v1407, %v1497
    %v1512 = vsub.f32 %v1431, %v1500
    %v1513 = vsub.f32 %v1455, %v1503
    %v1514 = vsub.f32 %v1479, %v1506
    %v1515 = vmul.f32 %v1507, 1.442695
    %v1516 = vpow.pop %v1515
    %v1517 = vmul.f32 %v1508, 1.442695
    %v1518 = vpow.pop %v1517
    %v1519 = vmul.f32 %v1509, 1.442695
    %v1520 = vpow.pop %v1519
    %v1521 = vmul.f32 %v1510, 1.442695
    %v1522 = vpow.pop %v1521
    %v1523 = vmul.f32 %v1511, 1.442695
    %v1524 = vpow.pop %v1523
    %v1525 = vmul.f32 %v1512, 1.442695
    %v1526 = vpow.pop %v1525
    %v1527 = vmul.f32 %v1513, 1.442695
    %v1528 = vpow.pop %v1527
    %v1529 = vmul.f32 %v1514, 1.442695
    %v1530 = vpow.pop %v1529
    %v1531 = vsel %vm1482, %v1516, 0.0
    %1532 = vadd.xlane.f32.xlu0 %v1531
    %v1533 = vpop.xlane.xlu0 %1532
    %v1534 = vsel %vm1482, %v1518, 0.0
    %1535 = vadd.xlane.f32.xlu0 %v1534
    %v1536 = vpop.xlane.xlu0 %1535
    %v1537 = vsel %vm1482, %v1520, 0.0
    %1538 = vadd.xlane.f32.xlu0 %v1537
    %v1539 = vpop.xlane.xlu0 %1538
    %v1540 = vsel %vm1482, %v1522, 0.0
    %1541 = vadd.xlane.f32.xlu0 %v1540
    %v1542 = vpop.xlane.xlu0 %1541
    %v1543 = vsel %vm1482, %v1524, 0.0
    %1544 = vadd.xlane.f32.xlu0 %v1543
    %v1545 = vpop.xlane.xlu0 %1544
    %v1546 = vsel %vm1482, %v1526, 0.0
    %1547 = vadd.xlane.f32.xlu0 %v1546
    %v1548 = vpop.xlane.xlu0 %1547
    %v1549 = vsel %vm1482, %v1528, 0.0
    %1550 = vadd.xlane.f32.xlu0 %v1549
    %v1551 = vpop.xlane.xlu0 %1550
    %v1552 = vsel %vm1482, %v1530, 0.0
    %1553 = vadd.xlane.f32.xlu0 %v1552
    %v1554 = vpop.xlane.xlu0 %1553
    %v1555 = vrcp.pop %v1533
    %v1556 = vrcp.pop %v1536
    %v1557 = vrcp.pop %v1539
    %v1558 = vrcp.pop %v1542
    %v1559 = vrcp.pop %v1545
    %v1560 = vrcp.pop %v1548
    %v1561 = vrcp.pop %v1551
    %v1562 = vrcp.pop %v1554
    %v1563 = vmul.f32 %v1516, %v1555
    %v1564 = vmul.f32 %v1518, %v1556
    %v1565 = vmul.f32 %v1520, %v1557
    %v1566 = vmul.f32 %v1522, %v1558
    %v1567 = vmul.f32 %v1524, %v1559
    %v1568 = vmul.f32 %v1526, %v1560
    %v1569 = vmul.f32 %v1528, %v1561
    %v1570 = vmul.f32 %v1530, %v1562
    %v1571 = vpack.c.bf16 %v1563, %v1563
    %v1572 = vpack.c.bf16 %v1564, %v1564
    %v1573 = vpack.c.bf16 %v1565, %v1565
    %v1574 = vpack.c.bf16 %v1566, %v1566
    %v1575 = vpack.c.bf16 %v1567, %v1567
    %v1576 = vpack.c.bf16 %v1568, %v1568
    %v1577 = vpack.c.bf16 %v1569, %v1569
    %v1578 = vpack.c.bf16 %v1570, %v1570
    %v1581 = vunpack.c.l.b16 %v1268
    %v1582 = vunpack.c.l.b16 %v1269
    %v1583 = vpack.c.b16 %v1582, %v1581
    %1584 = vrot.lane.b32.xlu0 %v1583, 96
    %v1585 = vpop.permute.xlu0 %1584
    %v1587 = vsel %vm1482, %v1571, 0
    %vm1589 = vcmask 1045504
    %v1591 = vsel %vm1589, %v1585, 0
    %1593 = vmatpush.bf16.msra.mxu0 0
    %1594 = vmatpush.bf16.msra.mxu0 0
    %1595 = vmatpush.bf16.msra.mxu0 0
    %1596 = vmatpush.bf16.msra.mxu0 0
    %1597 = vmatpush.bf16.msra.mxu0 0
    %1598 = vmatpush.bf16.msra.mxu0 0
    %1599 = vmatpush.bf16.msra.mxu0 0
    %1600 = vmatpush.bf16.msra.mxu0 %v1591
    %1601 = vmatmul.bf16.gmra.mxu0 %v1587
    %v1602 = vpop.f32.mrf.mxu0
    %v1603 = vadd.f32 0.0, %v1602
    %v1604 = vpop.f32.mrf.mxu0
    %1605 = vdwg.mxu0
    %v1608 = vunpack.c.l.b16 %v1270
    %v1609 = vunpack.c.l.b16 %v1271
    %v1610 = vpack.c.b16 %v1609, %v1608
    %1611 = vrot.lane.b32.xlu0 %v1610, 96
    %v1612 = vpop.permute.xlu0 %1611
    %v1614 = vsel %vm1482, %v1572, 0
    %v1617 = vsel %vm1589, %v1612, 0
    %1619 = vmatpush.bf16.msra.mxu0 0
    %1620 = vmatpush.bf16.msra.mxu0 0
    %1621 = vmatpush.bf16.msra.mxu0 0
    %1622 = vmatpush.bf16.msra.mxu0 0
    %1623 = vmatpush.bf16.msra.mxu0 0
    %1624 = vmatpush.bf16.msra.mxu0 0
    %1625 = vmatpush.bf16.msra.mxu0 0
    %1626 = vmatpush.bf16.msra.mxu0 %v1617
    %1627 = vmatmul.bf16.gmra.mxu0 %v1614
    %v1628 = vpop.f32.mrf.mxu0
    %v1629 = vadd.f32 0.0, %v1628
    %v1630 = vpop.f32.mrf.mxu0
    %1631 = vdwg.mxu0
    %v1634 = vunpack.c.l.b16 %v1272
    %v1635 = vunpack.c.l.b16 %v1273
    %v1636 = vpack.c.b16 %v1635, %v1634
    %1637 = vrot.lane.b32.xlu0 %v1636, 96
    %v1638 = vpop.permute.xlu0 %1637
    %v1640 = vsel %vm1482, %v1573, 0
    %v1643 = vsel %vm1589, %v1638, 0
    %1645 = vmatpush.bf16.msra.mxu0 0
    %1646 = vmatpush.bf16.msra.mxu0 0
    %1647 = vmatpush.bf16.msra.mxu0 0
    %1648 = vmatpush.bf16.msra.mxu0 0
    %1649 = vmatpush.bf16.msra.mxu0 0
    %1650 = vmatpush.bf16.msra.mxu0 0
    %1651 = vmatpush.bf16.msra.mxu0 0
    %1652 = vmatpush.bf16.msra.mxu0 %v1643
    %1653 = vmatmul.bf16.gmra.mxu0 %v1640
    %v1654 = vpop.f32.mrf.mxu0
    %v1655 = vadd.f32 0.0, %v1654
    %v1656 = vpop.f32.mrf.mxu0
    %1657 = vdwg.mxu0
    %v1660 = vunpack.c.l.b16 %v1274
    %v1661 = vunpack.c.l.b16 %v1275
    %v1662 = vpack.c.b16 %v1661, %v1660
    %1663 = vrot.lane.b32.xlu0 %v1662, 96
    %v1664 = vpop.permute.xlu0 %1663
    %v1666 = vsel %vm1482, %v1574, 0
    %v1669 = vsel %vm1589, %v1664, 0
    %1671 = vmatpush.bf16.msra.mxu0 0
    %1672 = vmatpush.bf16.msra.mxu0 0
    %1673 = vmatpush.bf16.msra.mxu0 0
    %1674 = vmatpush.bf16.msra.mxu0 0
    %1675 = vmatpush.bf16.msra.mxu0 0
    %1676 = vmatpush.bf16.msra.mxu0 0
    %1677 = vmatpush.bf16.msra.mxu0 0
    %1678 = vmatpush.bf16.msra.mxu0 %v1669
    %1679 = vmatmul.bf16.gmra.mxu0 %v1666
    %v1680 = vpop.f32.mrf.mxu0
    %v1681 = vadd.f32 0.0, %v1680
    %v1682 = vpop.f32.mrf.mxu0
    %1683 = vdwg.mxu0
    %v1686 = vunpack.c.l.b16 %v1276
    %v1687 = vunpack.c.l.b16 %v1277
    %v1688 = vpack.c.b16 %v1687, %v1686
    %1689 = vrot.lane.b32.xlu0 %v1688, 96
    %v1690 = vpop.permute.xlu0 %1689
    %v1692 = vsel %vm1482, %v1575, 0
    %v1695 = vsel %vm1589, %v1690, 0
    %1697 = vmatpush.bf16.msra.mxu0 0
    %1698 = vmatpush.bf16.msra.mxu0 0
    %1699 = vmatpush.bf16.msra.mxu0 0
    %1700 = vmatpush.bf16.msra.mxu0 0
    %1701 = vmatpush.bf16.msra.mxu0 0
    %1702 = vmatpush.bf16.msra.mxu0 0
    %1703 = vmatpush.bf16.msra.mxu0 0
    %1704 = vmatpush.bf16.msra.mxu0 %v1695
    %1705 = vmatmul.bf16.gmra.mxu0 %v1692
    %v1706 = vpop.f32.mrf.mxu0
    %v1707 = vadd.f32 0.0, %v1706
    %v1708 = vpop.f32.mrf.mxu0
    %1709 = vdwg.mxu0
    %v1712 = vunpack.c.l.b16 %v1278
    %v1713 = vunpack.c.l.b16 %v1279
    %v1714 = vpack.c.b16 %v1713, %v1712
    %1715 = vrot.lane.b32.xlu0 %v1714, 96
    %v1716 = vpop.permute.xlu0 %1715
    %v1718 = vsel %vm1482, %v1576, 0
    %v1721 = vsel %vm1589, %v1716, 0
    %1723 = vmatpush.bf16.msra.mxu0 0
    %1724 = vmatpush.bf16.msra.mxu0 0
    %1725 = vmatpush.bf16.msra.mxu0 0
    %1726 = vmatpush.bf16.msra.mxu0 0
    %1727 = vmatpush.bf16.msra.mxu0 0
    %1728 = vmatpush.bf16.msra.mxu0 0
    %1729 = vmatpush.bf16.msra.mxu0 0
    %1730 = vmatpush.bf16.msra.mxu0 %v1721
    %1731 = vmatmul.bf16.gmra.mxu0 %v1718
    %v1732 = vpop.f32.mrf.mxu0
    %v1733 = vadd.f32 0.0, %v1732
    %v1734 = vpop.f32.mrf.mxu0
    %1735 = vdwg.mxu0
    %v1738 = vunpack.c.l.b16 %v1280
    %v1739 = vunpack.c.l.b16 %v1281
    %v1740 = vpack.c.b16 %v1739, %v1738
    %1741 = vrot.lane.b32.xlu0 %v1740, 96
    %v1742 = vpop.permute.xlu0 %1741
    %v1744 = vsel %vm1482, %v1577, 0
    %v1747 = vsel %vm1589, %v1742, 0
    %1749 = vmatpush.bf16.msra.mxu0 0
    %1750 = vmatpush.bf16.msra.mxu0 0
    %1751 = vmatpush.bf16.msra.mxu0 0
    %1752 = vmatpush.bf16.msra.mxu0 0
    %1753 = vmatpush.bf16.msra.mxu0 0
    %1754 = vmatpush.bf16.msra.mxu0 0
    %1755 = vmatpush.bf16.msra.mxu0 0
    %1756 = vmatpush.bf16.msra.mxu0 %v1747
    %1757 = vmatmul.bf16.gmra.mxu0 %v1744
    %v1758 = vpop.f32.mrf.mxu0
    %v1759 = vadd.f32 0.0, %v1758
    %v1760 = vpop.f32.mrf.mxu0
    %1761 = vdwg.mxu0
    %v1764 = vunpack.c.l.b16 %v1282
    %v1765 = vunpack.c.l.b16 %v1283
    %v1766 = vpack.c.b16 %v1765, %v1764
    %1767 = vrot.lane.b32.xlu0 %v1766, 96
    %v1768 = vpop.permute.xlu0 %1767
    %v1770 = vsel %vm1482, %v1578, 0
    %v1773 = vsel %vm1589, %v1768, 0
    %1775 = vmatpush.bf16.msra.mxu0 0
    %1776 = vmatpush.bf16.msra.mxu0 0
    %1777 = vmatpush.bf16.msra.mxu0 0
    %1778 = vmatpush.bf16.msra.mxu0 0
    %1779 = vmatpush.bf16.msra.mxu0 0
    %1780 = vmatpush.bf16.msra.mxu0 0
    %1781 = vmatpush.bf16.msra.mxu0 0
    %1782 = vmatpush.bf16.msra.mxu0 %v1773
    %1783 = vmatmul.bf16.gmra.mxu0 %v1770
    %v1784 = vpop.f32.mrf.mxu0
    %v1785 = vadd.f32 0.0, %v1784
    %v1786 = vpop.f32.mrf.mxu0
    %1787 = vdwg.mxu0
    %1790 = vrot.lane.b32.xlu0 %v1655, 8
    %v1791 = vpop.permute.xlu0 %1790
    %1792 = vrot.lane.b32.xlu0 %v1681, 8
    %v1793 = vpop.permute.xlu0 %1792
    %1798 = vrot.lane.b32.xlu0 %v1707, 16
    %v1799 = vpop.permute.xlu0 %1798
    %1800 = vrot.lane.b32.xlu0 %v1733, 16
    %v1801 = vpop.permute.xlu0 %1800
    %1806 = vrot.lane.b32.xlu0 %v1759, 24
    %v1807 = vpop.permute.xlu0 %1806
    %1808 = vrot.lane.b32.xlu0 %v1785, 24
    %v1809 = vpop.permute.xlu0 %1808
    %v1812 = vsel %vm383, %v1603, %v1791
    %v1813 = vsel %vm383, %v1629, %v1793
    %v1814 = vsel %vm862, %v1812, %v1799
    %v1815 = vsel %vm862, %v1813, %v1801
    %v1816 = vsel %vm865, %v1814, %v1807
    %v1817 = vsel %vm865, %v1815, %v1809
    %v1818 = vpack.c.bf16 %v1817, %v1816
    %v1820 = vperm.slane %v222, 0
    %v1826 = vunpack.c.l.b16 %v218
    %v1827 = vunpack.c.l.b16 %v219
    %v1828 = vunpack.c.l.b16 %v220
    %v1829 = vunpack.c.l.b16 %v221
    %v1830 = vpack.c.b16 %v1827, %v1826
    %v1831 = vpack.c.b16 %v1829, %v1828
    %v1835 = vsel %vm249, %v1818, 0
    %1837 = vmatpush.bf16.msra.mxu0 0
    %1838 = vmatpush.bf16.msra.mxu0 0
    %1839 = vmatpush.bf16.msra.mxu0 0
    %1840 = vmatpush.bf16.msra.mxu0 0
    %1841 = vmatpush.bf16.msra.mxu0 0
    %1842 = vmatpush.bf16.msra.mxu0 0
    %1843 = vmatpush.bf16.msra.mxu0 %v1831
    %1844 = vmatpush.bf16.msra.mxu0 %v1830
    %1845 = vmatmul.bf16.gmra.mxu0 %v1835
    %v1846 = vpop.f32.mrf.mxu0
    %v1847 = vadd.f32 %v1820, %v1846
    %v1848 = vpop.f32.mrf.mxu0
    %v1849 = vadd.f32 %v1820, %v1848
    %1850 = vdwg.mxu0
    %v1851 = vadd.f32 %v901, %v1847
    %v1852 = vadd.f32 %v902, %v1849
    %v1853 = vsel %vm249, %v1851, 0.0
    %1854 = vadd.xlane.f32.xlu0 %v1853
    %v1855 = vpop.xlane.xlu0 %1854
    %v1856 = vsel %vm249, %v1852, 0.0
    %1857 = vadd.xlane.f32.xlu0 %v1856
    %v1858 = vpop.xlane.xlu0 %1857
    %v1859 = vmul.f32 %v1855, %v262
    %v1860 = vmul.f32 %v1858, %v262
    %v1861 = vsub.f32 %v1851, %v1859
    %v1862 = vsub.f32 %v1852, %v1860
    %v1863 = vmul.f32 %v1861, %v1861
    %v1864 = vmul.f32 %v1862, %v1862
    %v1865 = vsel %vm249, %v1863, 0.0
    %1866 = vadd.xlane.f32.xlu0 %v1865
    %v1867 = vpop.xlane.xlu0 %1866
    %v1868 = vsel %vm249, %v1864, 0.0
    %1869 = vadd.xlane.f32.xlu0 %v1868
    %v1870 = vpop.xlane.xlu0 %1869
    %v1871 = vmul.f32 %v1867, 0.032258064
    %v1872 = vmul.f32 %v1870, 0.032258064
    %v1873 = vrsqrt.pop %v1871
    %v1874 = vmul.f32 %v1873, %v1871
    %v1875 = vmul.f32 %v1874, %v1873
    %v1876 = vmul.f32 0.5, %v1875
    %v1877 = vsub.f32 1.5, %v1876
    %v1878 = vmul.f32 %v1873, %v1877
    %v1879 = vmul.f32 %v1871, %v1878
    %vm1880 = vcmp.eq.f32.partialorder %v1871, inf
    %v1881 = vsel %vm1880, %v1871, %v1879
    %vm1882 = vcmp.eq.f32.partialorder %v1871, 0.0
    %v1883 = vand.u32 %v1871, 2147483648
    %v1884 = vsel %vm1882, %v1883, %v1881
    %v1885 = vrsqrt.pop %v1872
    %v1886 = vmul.f32 %v1885, %v1872
    %v1887 = vmul.f32 %v1886, %v1885
    %v1888 = vmul.f32 0.5, %v1887
    %v1889 = vsub.f32 1.5, %v1888
    %v1890 = vmul.f32 %v1885, %v1889
    %v1891 = vmul.f32 %v1872, %v1890
    %vm1892 = vcmp.eq.f32.partialorder %v1872, inf
    %v1893 = vsel %vm1892, %v1872, %v1891
    %vm1894 = vcmp.eq.f32.partialorder %v1872, 0.0
    %v1895 = vand.u32 %v1872, 2147483648
    %v1896 = vsel %vm1894, %v1895, %v1893
    %v1897 = vadd.f32 %v1884, 1e-06
    %v1898 = vadd.f32 %v1896, 1e-06
    %v1899 = vrcp.pop %v1897
    %v1900 = vrcp.pop %v1898
    %v1901 = vmul.f32 %v1861, %v1899
    %v1902 = vmul.f32 %v1862, %v1900
    %v1904 = vperm.slane %v223, 0
    %v1906 = vmul.f32 %v1904, %v1901
    %v1907 = vmul.f32 %v1904, %v1902
    %v1909 = vperm.slane %v224, 0
    %v1911 = vadd.f32 %v1906, %v1909
    %v1912 = vadd.f32 %v1907, %v1909
    %v1913 = vpack.c.bf16 %v1912, %v1911
    %v1915 = vperm.slane %v229, 0
    %v1921 = vunpack.c.l.b16 %v225
    %v1922 = vunpack.c.l.b16 %v226
    %v1923 = vunpack.c.l.b16 %v227
    %v1924 = vunpack.c.l.b16 %v228
    %v1925 = vpack.c.b16 %v1922, %v1921
    %v1926 = vpack.c.b16 %v1924, %v1923
    %v1930 = vsel %vm249, %v1913, 0
    %1932 = vmatpush.bf16.msra.mxu0 0
    %1933 = vmatpush.bf16.msra.mxu0 0
    %1934 = vmatpush.bf16.msra.mxu0 0
    %1935 = vmatpush.bf16.msra.mxu0 0
    %1936 = vmatpush.bf16.msra.mxu0 0
    %1937 = vmatpush.bf16.msra.mxu0 0
    %1938 = vmatpush.bf16.msra.mxu0 %v1926
    %1939 = vmatpush.bf16.msra.mxu0 %v1925
    %1940 = vmatmul.bf16.gmra.mxu0 %v1930
    %v1941 = vpop.f32.mrf.mxu0
    %v1942 = vadd.f32 %v1915, %v1941
    %v1943 = vpop.f32.mrf.mxu0
    %v1944 = vadd.f32 %v1915, %v1943
    %1945 = vdwg.mxu0
    %v1946 = vmax.f32 %v1942, 0.0
    %v1947 = vmax.f32 %v1944, 0.0
    %v1948 = vpack.c.bf16 %v1947, %v1946
    %v1950 = vperm.slane %v238, 0
    %v1960 = vunpack.c.l.b16 %v230
    %v1961 = vunpack.c.l.b16 %v231
    %v1962 = vunpack.c.l.b16 %v232
    %v1963 = vunpack.c.l.b16 %v233
    %v1964 = vunpack.c.l.b16 %v234
    %v1965 = vunpack.c.l.b16 %v235
    %v1966 = vunpack.c.l.b16 %v236
    %v1967 = vunpack.c.l.b16 %v237
    %v1968 = vpack.c.b16 %v1961, %v1960
    %v1969 = vpack.c.b16 %v1963, %v1962
    %v1970 = vpack.c.b16 %v1965, %v1964
    %v1971 = vpack.c.b16 %v1967, %v1966
    %vm1976 = vcmask 523264
    %v1978 = vsel %vm1976, %v1948, 0
    %1980 = vmatpush.bf16.msra.mxu0 0
    %1981 = vmatpush.bf16.msra.mxu0 0
    %1982 = vmatpush.bf16.msra.mxu0 0
    %1983 = vmatpush.bf16.msra.mxu0 0
    %1984 = vmatpush.bf16.msra.mxu0 %v1971
    %1985 = vmatpush.bf16.msra.mxu0 %v1970
    %1986 = vmatpush.bf16.msra.mxu0 %v1969
    %1987 = vmatpush.bf16.msra.mxu0 %v1968
    %1988 = vmatmul.bf16.gmra.mxu0 %v1978
    %v1989 = vpop.f32.mrf.mxu0
    %v1990 = vadd.f32 %v1950, %v1989
    %v1991 = vpop.f32.mrf.mxu0
    %v1992 = vadd.f32 %v1950, %v1991
    %1993 = vdwg.mxu0
    %v1994 = vadd.f32 %v1851, %v1990
    %v1995 = vadd.f32 %v1852, %v1992
    %1996 = vst.msk [vmem:[#allocation16] sm:$0xff] %vm249, %v1994
    %1997 = vst.msk [vmem:[#allocation16 + $0x8] sm:$0xff] %vm249, %v1995
    // Predicated region
    $region130: #{tpu_custom_call.1} parent=1 // pred_check
      _
    $region131: #{tpu_custom_call.1} parent=1 // pred_check_branch
      %1999 = sbr.rel (0) target = $region133
    $region132: #{tpu_custom_call.1} parent=1 // pred_region
      %2001 = vsyncadd [#allocation4], 0
      %s2002 = sshll.u32 [#allocation16], 4
      %s2003 = int_to_ptr.vmem [resolvable:$true] %s2002
      %s2004 = sshll.u32 %s24, 4
      %s2005 = int_to_ptr.hbm [resolvable:$true] %s2004
      %2010 = dma.vmem_to_hbm [thread:$0]  %s2003, 256, %s2005, [#allocation4], 128, 128, 8
    $region133: #{tpu_custom_call.1} parent=1 // pred_fallthru
      _
    // Predicated region
    $region134: #{tpu_custom_call.1} parent=1 // pred_check
      _
    $region135: #{tpu_custom_call.1} parent=1 // pred_check_branch
      %2012 = sbr.rel (0) target = $region137
    $region136: #{tpu_custom_call.1} parent=1 // pred_region
      %2014 = dma.done [#allocation4], 256
    $region137: #{tpu_custom_call.1} parent=1 // pred_fallthru
      _
    %2015 = vsyncpa [#allocation3], 1
    %2016 = vsyncpa [#allocation6], 1
    %2017 = vsyncpa [#allocation9], 1
    %2018 = vsyncpa [#allocation12], 1
    %2019 = vsyncpa [#allocation15], 1
    %2020 = vsyncpa [#allocation4], 1

</llo_original>
